<compile_context>
chip_gen: v6e
topology: v6e:2x2x1
jax: 0.10.0
libtpu: 0.0.40
codegen_flags: <defaults>
</compile_context>

<pallas_src>
import functools

import jax
import jax.numpy as jnp
import numpy as np
from jax.experimental import pallas as pl
from jax.experimental.pallas import tpu as pltpu

# ----------------------------- config (small, deterministic) -----------------
BATCH = 2
IN_C = 4          # input_nc
NDF = 8           # ndf (d_down_dim)
INPUT_SIZE = 16   # input spatial size
NUM_D = 3         # number of discriminators in the multiscale stack
LEAKY_SLOPE = 0.2

_BICUBIC_W = (-0.09375, 0.59375, 0.59375, -0.09375)   # PyTorch bicubic, scale 0.5

# conv2 kernel-index (di in 0..3, pad=1, stride=2) -> s2d cell offset / parity
_DM_OF = (0, 1, 1, 2)
_R_OF = (1, 0, 1, 0)


# ----------------------------- fused Pallas kernel ---------------------------
def _fused_multiscale_kernel(pat_ref, w1_ref, w2_ref, misc_ref, o_ref, *, meta):
    """Whole MultiscaleDiscriminator forward in one kernel invocation."""
    (B, num_d, dims, c1off, c2off, row1off, row2off,
     b1w, b2w, n_head, n_out_rows) = meta
    f32 = jnp.float32

    # ---- conv1 of all scales & batch elements: one MXU pass + one VPU sweep ----
    b1 = misc_ref[0:1, 0:b1w]                                    # [1, sum(4*C1)]
    y1 = jnp.dot(pat_ref[...], w1_ref[...], preferred_element_type=f32) + b1
    y1 = jnp.where(y1 >= 0.0, y1, LEAKY_SLOPE * y1)              # [R1p, sum(4*C1)]

    # ---- build zero-padded s2d grids of the conv1 output as VALUES -------------
    flats = []                                                   # flats[s][b]
    for s in range(num_d):
        M1, N1, C1, _ = dims[s]
        NP, w = N1 + 2, 4 * C1
        c0 = c1off[s]
        per_b = []
        for b in range(B):
            off = row1off[s] + b * (M1 * N1)
            pieces = [jnp.zeros((NP + 1, w), f32)]
            for m in range(M1):
                pieces.append(y1[off + m * N1: off + (m + 1) * N1, c0:c0 + w])
                pieces.append(jnp.zeros((2, w), f32) if m < M1 - 1
                              else jnp.zeros((NP + 1, w), f32))
            per_b.append(jnp.concatenate(pieces, axis=0))        # [(M1+2)*NP, w]
        flats.append(per_b)

    # ---- conv2 == one K=288 dot over an im2col of the 9 s2d taps ---------------
    taps = []
    for dm in range(3):
        for dn in range(3):
            rows = []
            for s in range(num_d):
                M1, N1, _, _ = dims[s]
                NP = N1 + 2
                L0 = (M1 - 1) * NP + N1
                shift = dm * NP + dn
                for b in range(B):
                    rows.append(flats[s][b][shift:shift + L0, :])
            taps.append(jnp.concatenate(rows, axis=0))           # [R2, 4*C1]
    im2col = jnp.concatenate(taps, axis=1)                       # [R2, 9*4*C1]

    b2 = misc_ref[1:2, 0:b2w]                                    # [1, sum(C2)]
    y2 = jnp.dot(im2col, w2_ref[...], preferred_element_type=f32) + b2

    # ---- AdaptiveMaxPool2d(1): one masked sublane-max per (scale, batch) -------
    mx = {}
    for s in range(num_d):
        M1, N1, _, C2 = dims[s]
        NP = N1 + 2
        L0 = (M1 - 1) * NP + N1
        ri = jax.lax.broadcasted_iota(jnp.int32, (L0, 1), 0)
        valid = ri < N1                                          # skip wrap rows
        for i in range(1, M1):
            valid = valid | ((ri >= i * NP) & (ri < i * NP + N1))
        c0 = c2off[s]
        for b in range(B):
            r0 = row2off[s] + b * L0
            blk = jnp.where(valid, y2[r0:r0 + L0, c0:c0 + C2], -jnp.inf)
            mx[(s, b)] = jnp.max(blk, axis=0, keepdims=True)     # [1, C2]

    # ---- Flatten + Linear(C2, 1, bias=False) + Sigmoid for all heads at once ---
    C2 = dims[0][3]
    mx_rows = jnp.concatenate(
        [mx[(s, b)] for b in range(B) for s in range(num_d)], axis=0)  # [n_head, C2]
    wf = misc_ref[2:2 + n_head, 0:C2]                                  # [n_head, C2]
    logits = jnp.sum(mx_rows * wf, axis=1, keepdims=True)              # [n_head, 1]
    probs = 1.0 / (1.0 + jnp.exp(-logits))
    if n_out_rows > n_head:
        probs = jnp.concatenate(
            [probs, jnp.zeros((n_out_rows - n_head, 1), f32)], axis=0)
    o_ref[...] = jnp.broadcast_to(probs, (n_out_rows, 128))            # one store


# ----------------------------- one-time XLA prep ------------------------------
def _down_half_axis(x, axis):
    """Exact PyTorch bicubic 0.5x along one axis: src = 2*i + 0.5, a=-0.75, clamp."""
    n = x.shape[axis]
    lo = jax.lax.slice_in_dim(x, 0, 1, axis=axis)
    hi = jax.lax.slice_in_dim(x, n - 1, n, axis=axis)
    xp = jnp.concatenate([lo, x, hi], axis=axis)                  # replicate pad by 1
    out = None
    for t in range(4):
        sl = jax.lax.slice_in_dim(xp, t, t + n - 1, stride=2, axis=axis)
        term = _BICUBIC_W[t] * sl
        out = term if out is None else out + term
    return out


def bicubic_downsample_half_nhwc(x):
    return _down_half_axis(_down_half_axis(x, 1), 2)


def build_cell_patches(x):
    """x: [B,H,W,C] NHWC -> one row per s2d cell of the conv1 output: the 6x6xC
    (zero-padded) input window feeding that cell's 2x2 conv1 outputs."""
    B, H, W, C = x.shape
    M1, N1 = H // 4, W // 4
    xp = jnp.pad(x, ((0, 0), (1, 1), (1, 1), (0, 0)))
    cols = []
    for u in range(6):
        for v in range(6):
            cols.append(xp[:, u:u + 4 * M1 - 3:4, v:v + 4 * N1 - 3:4, :])  # [B,M1,N1,C]
    pat = jnp.stack(cols, axis=3)                                  # [B,M1,N1,36,C]
    return pat.reshape(B, M1 * N1, 36 * C)


def build_conv1_weight(w1):
    """w1: [C1, Cin, 4, 4] OIHW -> block-sparse [36*Cin, 4*C1] so that
    cell_patch @ W yields the 2x2 conv1 outputs channel-packed as (r, s, C1)."""
    C1, Cin = w1.shape[0], w1.shape[1]
    wt = jnp.transpose(w1, (2, 3, 1, 0)).astype(jnp.float32)       # [4,4,Cin,C1]
    big = jnp.zeros((6, 6, Cin, 2, 2, C1), jnp.float32)
    for r in range(2):
        for s_ in range(2):
            big = big.at[2 * r:2 * r + 4, 2 * s_:2 * s_ + 4, :, r, s_, :].set(wt)
    return big.reshape(36 * Cin, 4 * C1)


def build_conv2_blocks(w2):
    """w2: [C2, C1, 4, 4] OIHW -> 9 stacked [4*C1, C2] blocks (3x3 s2d-cell taps)."""
    C2, C1 = w2.shape[0], w2.shape[1]
    blk = jnp.zeros((3, 3, 2, 2, C1, C2), jnp.float32)
    for di in range(4):
        for dj in range(4):
            blk = blk.at[_DM_OF[di], _DM_OF[dj], _R_OF[di], _R_OF[dj]].set(
                jnp.transpose(w2[:, :, di, dj]).astype(jnp.float32))
    return blk.reshape(9 * 4 * C1, C2)


# ----------------------------- forward wrapper --------------------------------
def multiscale_forward(x_nchw, params_list):
    """MultiscaleDiscriminator.forward: list of per-scale [B,1] outputs."""
    x = jnp.transpose(x_nchw.astype(jnp.float32), (0, 2, 3, 1))    # NHWC
    scale_inputs = [x]
    for _ in range(NUM_D - 1):
        scale_inputs.append(bicubic_downsample_half_nhwc(scale_inputs[-1]))

    B, Cin = x.shape[0], x.shape[-1]
    dims, pats, w1s, w2s, b1s, b2s, wfcs = [], [], [], [], [], [], []
    for s in range(NUM_D):
        xs = scale_inputs[s]
        _, H, W, _ = xs.shape
        assert H % 4 == 0 and W % 4 == 0
        p = params_list[s]
        C1, C2 = p['w1'].shape[0], p['w2'].shape[0]
        M1, N1 = H // 4, W // 4
        dims.append((M1, N1, C1, C2))
        pats.append(build_cell_patches(xs).reshape(B * M1 * N1, 36 * Cin))
        w1s.append(build_conv1_weight(p['w1']))                    # [36*Cin, 4*C1]
        w2s.append(build_conv2_blocks(p['w2']))                    # [36*C1, C2]
        b1s.append(jnp.tile(p['b1'].reshape(1, C1).astype(jnp.float32), (1, 4)))
        b2s.append(p['b2'].reshape(1, C2).astype(jnp.float32))
        wfcs.append(p['wfc'].reshape(1, C2).astype(jnp.float32))

    C1, C2 = dims[0][2], dims[0][3]
    assert all(d[2] == C1 and d[3] == C2 for d in dims)            # identical arch

    c1off = tuple(s * 4 * C1 for s in range(NUM_D))
    c2off = tuple(s * C2 for s in range(NUM_D))
    row1off, row2off, r1, r2 = [], [], 0, 0
    for (M1, N1, _, _) in dims:
        row1off.append(r1); r1 += B * M1 * N1
        L0 = (M1 - 1) * (N1 + 2) + N1
        row2off.append(r2); r2 += B * L0
    R1 = r1
    R1p = ((R1 + 7) // 8) * 8

    pat_all = jnp.concatenate(pats, axis=0)                        # [R1, 36*Cin]
    if R1p > R1:
        pat_all = jnp.concatenate(
            [pat_all, jnp.zeros((R1p - R1, 36 * Cin), jnp.float32)], axis=0)
    w1_all = jnp.concatenate(w1s, axis=1)                          # [36*Cin, NUM_D*4*C1]
    w2_all = jnp.concatenate(w2s, axis=1)                          # [36*C1, NUM_D*C2]
    b1_all = jnp.concatenate(b1s, axis=1)                          # [1, NUM_D*4*C1]
    b2_all = jnp.concatenate(b2s, axis=1)                          # [1, NUM_D*C2]

    n_head = B * NUM_D
    n_out_rows = max(8, ((n_head + 7) // 8) * 8)
    wfc_rows = jnp.concatenate(
        [wfcs[s] for b in range(B) for s in range(NUM_D)], axis=0)  # [n_head, C2]

    misc_rows = max(8, 2 + n_head)
    misc_cols = max(128,
                    ((max(b1_all.shape[1], b2_all.shape[1], C2) + 127) // 128) * 128)
    misc = jnp.zeros((misc_rows, misc_cols), jnp.float32)
    misc = misc.at[0, 0:b1_all.shape[1]].set(b1_all[0])
    misc = misc.at[1, 0:b2_all.shape[1]].set(b2_all[0])
    misc = misc.at[2:2 + n_head, 0:C2].set(wfc_rows)

    meta = (B, NUM_D, tuple(dims), c1off, c2off,
            tuple(row1off), tuple(row2off),
            b1_all.shape[1], b2_all.shape[1], n_head, n_out_rows)

    out = pl.pallas_call(
        functools.partial(_fused_multiscale_kernel, meta=meta),
        out_shape=jax.ShapeDtypeStruct((n_out_rows, 128), jnp.float32),
        in_specs=[pl.BlockSpec(memory_space=pltpu.MemorySpace.VMEM)] * 4,
        out_specs=pl.BlockSpec(memory_space=pltpu.MemorySpace.VMEM),
    )(pat_all, w1_all, w2_all, misc)

    probs = out[:n_head, 0].reshape(B, NUM_D)
    return [probs[:, s:s + 1] for s in range(NUM_D)]


# ----------------------------- pure-JAX reference ------------------------------
def ref_simple_disc_nhwc(x, p):
    dn = ('NHWC', 'OIHW', 'NHWC')
    y = jax.lax.conv_general_dilated(x.astype(jnp.float32), p['w1'], (2, 2),
                                     ((1, 1), (1, 1)), dimension_numbers=dn)
    y = y + p['b1'][None, None, None, :]
    y = jnp.where(y > 0.0, y, LEAKY_SLOPE * y)
    y = jax.lax.conv_general_dilated(y, p['w2'], (2, 2),
                                     ((1, 1), (1, 1)), dimension_numbers=dn)
    y = y + p['b2'][None, None, None, :]
    m = jnp.max(y, axis=(1, 2))
    return jax.nn.sigmoid(m @ p['wfc'].T)


# ----------------------------- main --------------------------------------------
if __name__ == "__main__":
    key = jax.random.PRNGKey(0)

    # deterministic parameters for the 3 identical-architecture discriminators
    all_params = []
    for i in range(NUM_D):
        ks = jax.random.split(jax.random.fold_in(key, i), 5)
        all_params.append(dict(
            w1=0.1 * jax.random.normal(ks[0], (NDF, IN_C, 4, 4), jnp.float32),
            b1=0.1 * jax.random.normal(ks[1], (NDF,), jnp.float32),
            w2=0.1 * jax.random.normal(ks[2], (2 * NDF, NDF, 4, 4), jnp.float32),
            b2=0.1 * jax.random.normal(ks[3], (2 * NDF,), jnp.float32),
            wfc=0.1 * jax.random.normal(ks[4], (1, 2 * NDF), jnp.float32),
        ))

    x = jax.random.normal(jax.random.fold_in(key, 100),
                          (BATCH, IN_C, INPUT_SIZE, INPUT_SIZE), jnp.float32)

    fwd = jax.jit(multiscale_forward)
    outs = fwd(x, all_params)
    outs = [jax.block_until_ready(o) for o in outs]

    # verify against a pure-JAX (lax.conv) reference of the same forward pass
    xd = jnp.transpose(x, (0, 2, 3, 1))     # NHWC
    for i in range(NUM_D):
        ref = ref_simple_disc_nhwc(xd, all_params[i])
        assert outs[i].shape == (BATCH, 1)
        assert np.allclose(np.asarray(outs[i]), np.asarray(ref),
                           atol=1e-4, rtol=1e-4), f"mismatch at scale {i}"
        if i != NUM_D - 1:
            xd = bicubic_downsample_half_nhwc(xd)

    print("KERNEL_OK")
</pallas_src>

<mosaic_0001>
module attributes {stable_mosaic.version = 11 : i64} {
  func.func @_fused_multiscale_kernel(%arg0: memref<48x144xf32, #tpu.memory_space<vmem>>, %arg1: memref<144x96xf32, #tpu.memory_space<vmem>>, %arg2: memref<288x48xf32, #tpu.memory_space<vmem>>, %arg3: memref<8x128xf32, #tpu.memory_space<vmem>>, %arg4: memref<8x128xf32, #tpu.memory_space<vmem>>) attributes {dimension_semantics = [], scalar_prefetch = 0 : i64, scratch_operands = 0 : i64, tpu.core_type = #tpu.core_type<tc>} {
    %c0 = arith.constant 0 : index
    %c0_0 = arith.constant 0 : index
    %0 = vector.load %arg3[%c0, %c0_0] : memref<8x128xf32, #tpu.memory_space<vmem>>, vector<1x96xf32>
    %c0_1 = arith.constant 0 : index
    %c0_2 = arith.constant 0 : index
    %1 = vector.load %arg0[%c0_1, %c0_2] : memref<48x144xf32, #tpu.memory_space<vmem>>, vector<48x144xf32>
    %c0_3 = arith.constant 0 : index
    %c0_4 = arith.constant 0 : index
    %2 = vector.load %arg1[%c0_3, %c0_4] : memref<144x96xf32, #tpu.memory_space<vmem>>, vector<144x96xf32>
    %cst = arith.constant dense<0.000000e+00> : vector<48x96xf32>
    %3 = tpu.matmul %1, %2, %cst {dimension_numbers = #tpu.dot_dimension_numbers<[1], [0], [0], [1], [0, 0, 1, 1], [], []>} : vector<48x144xf32>, vector<144x96xf32>, vector<48x96xf32> -> vector<48x96xf32>
    %4 = vector.broadcast %0 : vector<1x96xf32> to vector<48x96xf32>
    %5 = arith.addf %3, %4 : vector<48x96xf32>
    %cst_5 = arith.constant 0.000000e+00 : f32
    %6 = vector.broadcast %cst_5 : f32 to vector<48x96xf32>
    %7 = arith.cmpf oge, %5, %6 : vector<48x96xf32>
    %cst_6 = arith.constant 2.000000e-01 : f32
    %8 = vector.broadcast %cst_6 : f32 to vector<48x96xf32>
    %9 = arith.mulf %8, %5 : vector<48x96xf32>
    %10 = arith.select %7, %5, %9 : vector<48x96xi1>, vector<48x96xf32>
    %cst_7 = arith.constant 0.000000e+00 : f32
    %11 = vector.broadcast %cst_7 : f32 to vector<7x32xf32>
    %12 = vector.extract_strided_slice %10 {offsets = [0, 0], sizes = [4, 32], strides = [1, 1]} : vector<48x96xf32> to vector<4x32xf32>
    %cst_8 = arith.constant 0.000000e+00 : f32
    %13 = vector.broadcast %cst_8 : f32 to vector<2x32xf32>
    %14 = vector.extract_strided_slice %10 {offsets = [4, 0], sizes = [4, 32], strides = [1, 1]} : vector<48x96xf32> to vector<4x32xf32>
    %cst_9 = arith.constant 0.000000e+00 : f32
    %15 = vector.broadcast %cst_9 : f32 to vector<2x32xf32>
    %16 = vector.extract_strided_slice %10 {offsets = [8, 0], sizes = [4, 32], strides = [1, 1]} : vector<48x96xf32> to vector<4x32xf32>
    %cst_10 = arith.constant 0.000000e+00 : f32
    %17 = vector.broadcast %cst_10 : f32 to vector<2x32xf32>
    %18 = vector.extract_strided_slice %10 {offsets = [12, 0], sizes = [4, 32], strides = [1, 1]} : vector<48x96xf32> to vector<4x32xf32>
    %cst_11 = arith.constant 0.000000e+00 : f32
    %19 = vector.broadcast %cst_11 : f32 to vector<7x32xf32>
    %20 = tpu.concatenate %11, %12, %13, %14, %15, %16, %17, %18, %19 in 0 : vector<7x32xf32>, vector<4x32xf32>, vector<2x32xf32>, vector<4x32xf32>, vector<2x32xf32>, vector<4x32xf32>, vector<2x32xf32>, vector<4x32xf32>, vector<7x32xf32> -> vector<36x32xf32>
    %cst_12 = arith.constant 0.000000e+00 : f32
    %21 = vector.broadcast %cst_12 : f32 to vector<7x32xf32>
    %22 = vector.extract_strided_slice %10 {offsets = [16, 0], sizes = [4, 32], strides = [1, 1]} : vector<48x96xf32> to vector<4x32xf32>
    %cst_13 = arith.constant 0.000000e+00 : f32
    %23 = vector.broadcast %cst_13 : f32 to vector<2x32xf32>
    %24 = vector.extract_strided_slice %10 {offsets = [20, 0], sizes = [4, 32], strides = [1, 1]} : vector<48x96xf32> to vector<4x32xf32>
    %cst_14 = arith.constant 0.000000e+00 : f32
    %25 = vector.broadcast %cst_14 : f32 to vector<2x32xf32>
    %26 = vector.extract_strided_slice %10 {offsets = [24, 0], sizes = [4, 32], strides = [1, 1]} : vector<48x96xf32> to vector<4x32xf32>
    %cst_15 = arith.constant 0.000000e+00 : f32
    %27 = vector.broadcast %cst_15 : f32 to vector<2x32xf32>
    %28 = vector.extract_strided_slice %10 {offsets = [28, 0], sizes = [4, 32], strides = [1, 1]} : vector<48x96xf32> to vector<4x32xf32>
    %cst_16 = arith.constant 0.000000e+00 : f32
    %29 = vector.broadcast %cst_16 : f32 to vector<7x32xf32>
    %30 = tpu.concatenate %21, %22, %23, %24, %25, %26, %27, %28, %29 in 0 : vector<7x32xf32>, vector<4x32xf32>, vector<2x32xf32>, vector<4x32xf32>, vector<2x32xf32>, vector<4x32xf32>, vector<2x32xf32>, vector<4x32xf32>, vector<7x32xf32> -> vector<36x32xf32>
    %cst_17 = arith.constant 0.000000e+00 : f32
    %31 = vector.broadcast %cst_17 : f32 to vector<5x32xf32>
    %32 = vector.extract_strided_slice %10 {offsets = [32, 32], sizes = [2, 32], strides = [1, 1]} : vector<48x96xf32> to vector<2x32xf32>
    %cst_18 = arith.constant 0.000000e+00 : f32
    %33 = vector.broadcast %cst_18 : f32 to vector<2x32xf32>
    %34 = vector.extract_strided_slice %10 {offsets = [34, 32], sizes = [2, 32], strides = [1, 1]} : vector<48x96xf32> to vector<2x32xf32>
    %cst_19 = arith.constant 0.000000e+00 : f32
    %35 = vector.broadcast %cst_19 : f32 to vector<5x32xf32>
    %36 = tpu.concatenate %31, %32, %33, %34, %35 in 0 : vector<5x32xf32>, vector<2x32xf32>, vector<2x32xf32>, vector<2x32xf32>, vector<5x32xf32> -> vector<16x32xf32>
    %cst_20 = arith.constant 0.000000e+00 : f32
    %37 = vector.broadcast %cst_20 : f32 to vector<5x32xf32>
    %38 = vector.extract_strided_slice %10 {offsets = [36, 32], sizes = [2, 32], strides = [1, 1]} : vector<48x96xf32> to vector<2x32xf32>
    %cst_21 = arith.constant 0.000000e+00 : f32
    %39 = vector.broadcast %cst_21 : f32 to vector<2x32xf32>
    %40 = vector.extract_strided_slice %10 {offsets = [38, 32], sizes = [2, 32], strides = [1, 1]} : vector<48x96xf32> to vector<2x32xf32>
    %cst_22 = arith.constant 0.000000e+00 : f32
    %41 = vector.broadcast %cst_22 : f32 to vector<5x32xf32>
    %42 = tpu.concatenate %37, %38, %39, %40, %41 in 0 : vector<5x32xf32>, vector<2x32xf32>, vector<2x32xf32>, vector<2x32xf32>, vector<5x32xf32> -> vector<16x32xf32>
    %cst_23 = arith.constant 0.000000e+00 : f32
    %43 = vector.broadcast %cst_23 : f32 to vector<4x32xf32>
    %44 = vector.extract_strided_slice %10 {offsets = [40, 64], sizes = [1, 32], strides = [1, 1]} : vector<48x96xf32> to vector<1x32xf32>
    %cst_24 = arith.constant 0.000000e+00 : f32
    %45 = vector.broadcast %cst_24 : f32 to vector<4x32xf32>
    %46 = tpu.concatenate %43, %44, %45 in 0 : vector<4x32xf32>, vector<1x32xf32>, vector<4x32xf32> -> vector<9x32xf32>
    %cst_25 = arith.constant 0.000000e+00 : f32
    %47 = vector.broadcast %cst_25 : f32 to vector<4x32xf32>
    %48 = vector.extract_strided_slice %10 {offsets = [41, 64], sizes = [1, 32], strides = [1, 1]} : vector<48x96xf32> to vector<1x32xf32>
    %cst_26 = arith.constant 0.000000e+00 : f32
    %49 = vector.broadcast %cst_26 : f32 to vector<4x32xf32>
    %50 = tpu.concatenate %47, %48, %49 in 0 : vector<4x32xf32>, vector<1x32xf32>, vector<4x32xf32> -> vector<9x32xf32>
    %51 = vector.extract_strided_slice %20 {offsets = [0, 0], sizes = [22, 32], strides = [1, 1]} : vector<36x32xf32> to vector<22x32xf32>
    %52 = vector.extract_strided_slice %30 {offsets = [0, 0], sizes = [22, 32], strides = [1, 1]} : vector<36x32xf32> to vector<22x32xf32>
    %53 = vector.extract_strided_slice %36 {offsets = [0, 0], sizes = [6, 32], strides = [1, 1]} : vector<16x32xf32> to vector<6x32xf32>
    %54 = vector.extract_strided_slice %42 {offsets = [0, 0], sizes = [6, 32], strides = [1, 1]} : vector<16x32xf32> to vector<6x32xf32>
    %55 = vector.extract_strided_slice %46 {offsets = [0, 0], sizes = [1, 32], strides = [1, 1]} : vector<9x32xf32> to vector<1x32xf32>
    %56 = vector.extract_strided_slice %50 {offsets = [0, 0], sizes = [1, 32], strides = [1, 1]} : vector<9x32xf32> to vector<1x32xf32>
    %57 = tpu.concatenate %51, %52, %53, %54, %55, %56 in 0 : vector<22x32xf32>, vector<22x32xf32>, vector<6x32xf32>, vector<6x32xf32>, vector<1x32xf32>, vector<1x32xf32> -> vector<58x32xf32>
    %58 = vector.extract_strided_slice %20 {offsets = [1, 0], sizes = [22, 32], strides = [1, 1]} : vector<36x32xf32> to vector<22x32xf32>
    %59 = vector.extract_strided_slice %30 {offsets = [1, 0], sizes = [22, 32], strides = [1, 1]} : vector<36x32xf32> to vector<22x32xf32>
    %60 = vector.extract_strided_slice %36 {offsets = [1, 0], sizes = [6, 32], strides = [1, 1]} : vector<16x32xf32> to vector<6x32xf32>
    %61 = vector.extract_strided_slice %42 {offsets = [1, 0], sizes = [6, 32], strides = [1, 1]} : vector<16x32xf32> to vector<6x32xf32>
    %62 = vector.extract_strided_slice %46 {offsets = [1, 0], sizes = [1, 32], strides = [1, 1]} : vector<9x32xf32> to vector<1x32xf32>
    %63 = vector.extract_strided_slice %50 {offsets = [1, 0], sizes = [1, 32], strides = [1, 1]} : vector<9x32xf32> to vector<1x32xf32>
    %64 = tpu.concatenate %58, %59, %60, %61, %62, %63 in 0 : vector<22x32xf32>, vector<22x32xf32>, vector<6x32xf32>, vector<6x32xf32>, vector<1x32xf32>, vector<1x32xf32> -> vector<58x32xf32>
    %65 = vector.extract_strided_slice %20 {offsets = [2, 0], sizes = [22, 32], strides = [1, 1]} : vector<36x32xf32> to vector<22x32xf32>
    %66 = vector.extract_strided_slice %30 {offsets = [2, 0], sizes = [22, 32], strides = [1, 1]} : vector<36x32xf32> to vector<22x32xf32>
    %67 = vector.extract_strided_slice %36 {offsets = [2, 0], sizes = [6, 32], strides = [1, 1]} : vector<16x32xf32> to vector<6x32xf32>
    %68 = vector.extract_strided_slice %42 {offsets = [2, 0], sizes = [6, 32], strides = [1, 1]} : vector<16x32xf32> to vector<6x32xf32>
    %69 = vector.extract_strided_slice %46 {offsets = [2, 0], sizes = [1, 32], strides = [1, 1]} : vector<9x32xf32> to vector<1x32xf32>
    %70 = vector.extract_strided_slice %50 {offsets = [2, 0], sizes = [1, 32], strides = [1, 1]} : vector<9x32xf32> to vector<1x32xf32>
    %71 = tpu.concatenate %65, %66, %67, %68, %69, %70 in 0 : vector<22x32xf32>, vector<22x32xf32>, vector<6x32xf32>, vector<6x32xf32>, vector<1x32xf32>, vector<1x32xf32> -> vector<58x32xf32>
    %72 = vector.extract_strided_slice %20 {offsets = [6, 0], sizes = [22, 32], strides = [1, 1]} : vector<36x32xf32> to vector<22x32xf32>
    %73 = vector.extract_strided_slice %30 {offsets = [6, 0], sizes = [22, 32], strides = [1, 1]} : vector<36x32xf32> to vector<22x32xf32>
    %74 = vector.extract_strided_slice %36 {offsets = [4, 0], sizes = [6, 32], strides = [1, 1]} : vector<16x32xf32> to vector<6x32xf32>
    %75 = vector.extract_strided_slice %42 {offsets = [4, 0], sizes = [6, 32], strides = [1, 1]} : vector<16x32xf32> to vector<6x32xf32>
    %76 = vector.extract_strided_slice %46 {offsets = [3, 0], sizes = [1, 32], strides = [1, 1]} : vector<9x32xf32> to vector<1x32xf32>
    %77 = vector.extract_strided_slice %50 {offsets = [3, 0], sizes = [1, 32], strides = [1, 1]} : vector<9x32xf32> to vector<1x32xf32>
    %78 = tpu.concatenate %72, %73, %74, %75, %76, %77 in 0 : vector<22x32xf32>, vector<22x32xf32>, vector<6x32xf32>, vector<6x32xf32>, vector<1x32xf32>, vector<1x32xf32> -> vector<58x32xf32>
    %79 = vector.extract_strided_slice %20 {offsets = [7, 0], sizes = [22, 32], strides = [1, 1]} : vector<36x32xf32> to vector<22x32xf32>
    %80 = vector.extract_strided_slice %30 {offsets = [7, 0], sizes = [22, 32], strides = [1, 1]} : vector<36x32xf32> to vector<22x32xf32>
    %81 = vector.extract_strided_slice %36 {offsets = [5, 0], sizes = [6, 32], strides = [1, 1]} : vector<16x32xf32> to vector<6x32xf32>
    %82 = vector.extract_strided_slice %42 {offsets = [5, 0], sizes = [6, 32], strides = [1, 1]} : vector<16x32xf32> to vector<6x32xf32>
    %83 = vector.extract_strided_slice %46 {offsets = [4, 0], sizes = [1, 32], strides = [1, 1]} : vector<9x32xf32> to vector<1x32xf32>
    %84 = vector.extract_strided_slice %50 {offsets = [4, 0], sizes = [1, 32], strides = [1, 1]} : vector<9x32xf32> to vector<1x32xf32>
    %85 = tpu.concatenate %79, %80, %81, %82, %83, %84 in 0 : vector<22x32xf32>, vector<22x32xf32>, vector<6x32xf32>, vector<6x32xf32>, vector<1x32xf32>, vector<1x32xf32> -> vector<58x32xf32>
    %86 = vector.extract_strided_slice %20 {offsets = [8, 0], sizes = [22, 32], strides = [1, 1]} : vector<36x32xf32> to vector<22x32xf32>
    %87 = vector.extract_strided_slice %30 {offsets = [8, 0], sizes = [22, 32], strides = [1, 1]} : vector<36x32xf32> to vector<22x32xf32>
    %88 = vector.extract_strided_slice %36 {offsets = [6, 0], sizes = [6, 32], strides = [1, 1]} : vector<16x32xf32> to vector<6x32xf32>
    %89 = vector.extract_strided_slice %42 {offsets = [6, 0], sizes = [6, 32], strides = [1, 1]} : vector<16x32xf32> to vector<6x32xf32>
    %90 = vector.extract_strided_slice %46 {offsets = [5, 0], sizes = [1, 32], strides = [1, 1]} : vector<9x32xf32> to vector<1x32xf32>
    %91 = vector.extract_strided_slice %50 {offsets = [5, 0], sizes = [1, 32], strides = [1, 1]} : vector<9x32xf32> to vector<1x32xf32>
    %92 = tpu.concatenate %86, %87, %88, %89, %90, %91 in 0 : vector<22x32xf32>, vector<22x32xf32>, vector<6x32xf32>, vector<6x32xf32>, vector<1x32xf32>, vector<1x32xf32> -> vector<58x32xf32>
    %93 = vector.extract_strided_slice %20 {offsets = [12, 0], sizes = [22, 32], strides = [1, 1]} : vector<36x32xf32> to vector<22x32xf32>
    %94 = vector.extract_strided_slice %30 {offsets = [12, 0], sizes = [22, 32], strides = [1, 1]} : vector<36x32xf32> to vector<22x32xf32>
    %95 = vector.extract_strided_slice %36 {offsets = [8, 0], sizes = [6, 32], strides = [1, 1]} : vector<16x32xf32> to vector<6x32xf32>
    %96 = vector.extract_strided_slice %42 {offsets = [8, 0], sizes = [6, 32], strides = [1, 1]} : vector<16x32xf32> to vector<6x32xf32>
    %97 = vector.extract_strided_slice %46 {offsets = [6, 0], sizes = [1, 32], strides = [1, 1]} : vector<9x32xf32> to vector<1x32xf32>
    %98 = vector.extract_strided_slice %50 {offsets = [6, 0], sizes = [1, 32], strides = [1, 1]} : vector<9x32xf32> to vector<1x32xf32>
    %99 = tpu.concatenate %93, %94, %95, %96, %97, %98 in 0 : vector<22x32xf32>, vector<22x32xf32>, vector<6x32xf32>, vector<6x32xf32>, vector<1x32xf32>, vector<1x32xf32> -> vector<58x32xf32>
    %100 = vector.extract_strided_slice %20 {offsets = [13, 0], sizes = [22, 32], strides = [1, 1]} : vector<36x32xf32> to vector<22x32xf32>
    %101 = vector.extract_strided_slice %30 {offsets = [13, 0], sizes = [22, 32], strides = [1, 1]} : vector<36x32xf32> to vector<22x32xf32>
    %102 = vector.extract_strided_slice %36 {offsets = [9, 0], sizes = [6, 32], strides = [1, 1]} : vector<16x32xf32> to vector<6x32xf32>
    %103 = vector.extract_strided_slice %42 {offsets = [9, 0], sizes = [6, 32], strides = [1, 1]} : vector<16x32xf32> to vector<6x32xf32>
    %104 = vector.extract_strided_slice %46 {offsets = [7, 0], sizes = [1, 32], strides = [1, 1]} : vector<9x32xf32> to vector<1x32xf32>
    %105 = vector.extract_strided_slice %50 {offsets = [7, 0], sizes = [1, 32], strides = [1, 1]} : vector<9x32xf32> to vector<1x32xf32>
    %106 = tpu.concatenate %100, %101, %102, %103, %104, %105 in 0 : vector<22x32xf32>, vector<22x32xf32>, vector<6x32xf32>, vector<6x32xf32>, vector<1x32xf32>, vector<1x32xf32> -> vector<58x32xf32>
    %107 = vector.extract_strided_slice %20 {offsets = [14, 0], sizes = [22, 32], strides = [1, 1]} : vector<36x32xf32> to vector<22x32xf32>
    %108 = vector.extract_strided_slice %30 {offsets = [14, 0], sizes = [22, 32], strides = [1, 1]} : vector<36x32xf32> to vector<22x32xf32>
    %109 = vector.extract_strided_slice %36 {offsets = [10, 0], sizes = [6, 32], strides = [1, 1]} : vector<16x32xf32> to vector<6x32xf32>
    %110 = vector.extract_strided_slice %42 {offsets = [10, 0], sizes = [6, 32], strides = [1, 1]} : vector<16x32xf32> to vector<6x32xf32>
    %111 = vector.extract_strided_slice %46 {offsets = [8, 0], sizes = [1, 32], strides = [1, 1]} : vector<9x32xf32> to vector<1x32xf32>
    %112 = vector.extract_strided_slice %50 {offsets = [8, 0], sizes = [1, 32], strides = [1, 1]} : vector<9x32xf32> to vector<1x32xf32>
    %113 = tpu.concatenate %107, %108, %109, %110, %111, %112 in 0 : vector<22x32xf32>, vector<22x32xf32>, vector<6x32xf32>, vector<6x32xf32>, vector<1x32xf32>, vector<1x32xf32> -> vector<58x32xf32>
    %114 = tpu.concatenate %57, %64, %71, %78, %85, %92, %99, %106, %113 in 1 : vector<58x32xf32>, vector<58x32xf32>, vector<58x32xf32>, vector<58x32xf32>, vector<58x32xf32>, vector<58x32xf32>, vector<58x32xf32>, vector<58x32xf32>, vector<58x32xf32> -> vector<58x288xf32>
    %c1 = arith.constant 1 : index
    %c0_27 = arith.constant 0 : index
    %115 = vector.load %arg3[%c1, %c0_27] : memref<8x128xf32, #tpu.memory_space<vmem>>, vector<1x48xf32>
    %c0_28 = arith.constant 0 : index
    %c0_29 = arith.constant 0 : index
    %116 = vector.load %arg2[%c0_28, %c0_29] : memref<288x48xf32, #tpu.memory_space<vmem>>, vector<288x48xf32>
    %cst_30 = arith.constant dense<0.000000e+00> : vector<58x48xf32>
    %117 = tpu.matmul %114, %116, %cst_30 {dimension_numbers = #tpu.dot_dimension_numbers<[1], [0], [0], [1], [0, 0, 1, 1], [], []>} : vector<58x288xf32>, vector<288x48xf32>, vector<58x48xf32> -> vector<58x48xf32>
    %118 = vector.broadcast %115 : vector<1x48xf32> to vector<58x48xf32>
    %119 = arith.addf %117, %118 : vector<58x48xf32>
    %120 = tpu.iota {dimensions = array<i32: 0>} : vector<22x1xi32>
    %c4_i32 = arith.constant 4 : i32
    %121 = vector.broadcast %c4_i32 : i32 to vector<22x1xi32>
    %122 = arith.cmpi slt, %120, %121 : vector<22x1xi32>
    %c6_i32 = arith.constant 6 : i32
    %123 = vector.broadcast %c6_i32 : i32 to vector<22x1xi32>
    %124 = arith.cmpi sge, %120, %123 : vector<22x1xi32>
    %c10_i32 = arith.constant 10 : i32
    %125 = vector.broadcast %c10_i32 : i32 to vector<22x1xi32>
    %126 = arith.cmpi slt, %120, %125 : vector<22x1xi32>
    %127 = arith.andi %124, %126 : vector<22x1xi1>
    %128 = arith.ori %122, %127 : vector<22x1xi1>
    %c12_i32 = arith.constant 12 : i32
    %129 = vector.broadcast %c12_i32 : i32 to vector<22x1xi32>
    %130 = arith.cmpi sge, %120, %129 : vector<22x1xi32>
    %c16_i32 = arith.constant 16 : i32
    %131 = vector.broadcast %c16_i32 : i32 to vector<22x1xi32>
    %132 = arith.cmpi slt, %120, %131 : vector<22x1xi32>
    %133 = arith.andi %130, %132 : vector<22x1xi1>
    %134 = arith.ori %128, %133 : vector<22x1xi1>
    %c18_i32 = arith.constant 18 : i32
    %135 = vector.broadcast %c18_i32 : i32 to vector<22x1xi32>
    %136 = arith.cmpi sge, %120, %135 : vector<22x1xi32>
    %c22_i32 = arith.constant 22 : i32
    %137 = vector.broadcast %c22_i32 : i32 to vector<22x1xi32>
    %138 = arith.cmpi slt, %120, %137 : vector<22x1xi32>
    %139 = arith.andi %136, %138 : vector<22x1xi1>
    %140 = arith.ori %134, %139 : vector<22x1xi1>
    %141 = vector.extract_strided_slice %119 {offsets = [0, 0], sizes = [22, 16], strides = [1, 1]} : vector<58x48xf32> to vector<22x16xf32>
    %cst_31 = arith.constant 0xFF800000 : f32
    %142 = vector.shape_cast %140 : vector<22x1xi1> to vector<22x1xi1>
    %143 = vector.broadcast %142 : vector<22x1xi1> to vector<22x16xi1>
    %144 = vector.broadcast %cst_31 : f32 to vector<22x16xf32>
    %145 = arith.select %143, %141, %144 : vector<22x16xi1>, vector<22x16xf32>
    %cst_32 = arith.constant dense<0xFF800000> : vector<16xf32>
    %146 = vector.multi_reduction <maximumf>, %145, %cst_32 [0] : vector<22x16xf32> to vector<16xf32>
    %147 = vector.shape_cast %146 : vector<16xf32> to vector<1x16xf32>
    %148 = vector.extract_strided_slice %119 {offsets = [22, 0], sizes = [22, 16], strides = [1, 1]} : vector<58x48xf32> to vector<22x16xf32>
    %cst_33 = arith.constant 0xFF800000 : f32
    %149 = vector.shape_cast %140 : vector<22x1xi1> to vector<22x1xi1>
    %150 = vector.broadcast %149 : vector<22x1xi1> to vector<22x16xi1>
    %151 = vector.broadcast %cst_33 : f32 to vector<22x16xf32>
    %152 = arith.select %150, %148, %151 : vector<22x16xi1>, vector<22x16xf32>
    %cst_34 = arith.constant dense<0xFF800000> : vector<16xf32>
    %153 = vector.multi_reduction <maximumf>, %152, %cst_34 [0] : vector<22x16xf32> to vector<16xf32>
    %154 = vector.shape_cast %153 : vector<16xf32> to vector<1x16xf32>
    %155 = tpu.iota {dimensions = array<i32: 0>} : vector<6x1xi32>
    %c2_i32 = arith.constant 2 : i32
    %156 = vector.broadcast %c2_i32 : i32 to vector<6x1xi32>
    %157 = arith.cmpi slt, %155, %156 : vector<6x1xi32>
    %c4_i32_35 = arith.constant 4 : i32
    %158 = vector.broadcast %c4_i32_35 : i32 to vector<6x1xi32>
    %159 = arith.cmpi sge, %155, %158 : vector<6x1xi32>
    %c6_i32_36 = arith.constant 6 : i32
    %160 = vector.broadcast %c6_i32_36 : i32 to vector<6x1xi32>
    %161 = arith.cmpi slt, %155, %160 : vector<6x1xi32>
    %162 = arith.andi %159, %161 : vector<6x1xi1>
    %163 = arith.ori %157, %162 : vector<6x1xi1>
    %164 = vector.extract_strided_slice %119 {offsets = [44, 16], sizes = [6, 16], strides = [1, 1]} : vector<58x48xf32> to vector<6x16xf32>
    %cst_37 = arith.constant 0xFF800000 : f32
    %165 = vector.shape_cast %163 : vector<6x1xi1> to vector<6x1xi1>
    %166 = vector.broadcast %165 : vector<6x1xi1> to vector<6x16xi1>
    %167 = vector.broadcast %cst_37 : f32 to vector<6x16xf32>
    %168 = arith.select %166, %164, %167 : vector<6x16xi1>, vector<6x16xf32>
    %cst_38 = arith.constant dense<0xFF800000> : vector<16xf32>
    %169 = vector.multi_reduction <maximumf>, %168, %cst_38 [0] : vector<6x16xf32> to vector<16xf32>
    %170 = vector.shape_cast %169 : vector<16xf32> to vector<1x16xf32>
    %171 = vector.extract_strided_slice %119 {offsets = [50, 16], sizes = [6, 16], strides = [1, 1]} : vector<58x48xf32> to vector<6x16xf32>
    %cst_39 = arith.constant 0xFF800000 : f32
    %172 = vector.shape_cast %163 : vector<6x1xi1> to vector<6x1xi1>
    %173 = vector.broadcast %172 : vector<6x1xi1> to vector<6x16xi1>
    %174 = vector.broadcast %cst_39 : f32 to vector<6x16xf32>
    %175 = arith.select %173, %171, %174 : vector<6x16xi1>, vector<6x16xf32>
    %cst_40 = arith.constant dense<0xFF800000> : vector<16xf32>
    %176 = vector.multi_reduction <maximumf>, %175, %cst_40 [0] : vector<6x16xf32> to vector<16xf32>
    %177 = vector.shape_cast %176 : vector<16xf32> to vector<1x16xf32>
    %178 = tpu.iota {dimensions = array<i32: 0>} : vector<1x1xi32>
    %c1_i32 = arith.constant 1 : i32
    %179 = vector.broadcast %c1_i32 : i32 to vector<1x1xi32>
    %180 = arith.cmpi slt, %178, %179 : vector<1x1xi32>
    %181 = vector.extract_strided_slice %119 {offsets = [56, 32], sizes = [1, 16], strides = [1, 1]} : vector<58x48xf32> to vector<1x16xf32>
    %cst_41 = arith.constant 0xFF800000 : f32
    %182 = vector.shape_cast %180 : vector<1x1xi1> to vector<1x1xi1>
    %183 = vector.broadcast %182 : vector<1x1xi1> to vector<1x16xi1>
    %184 = vector.broadcast %cst_41 : f32 to vector<1x16xf32>
    %185 = arith.select %183, %181, %184 : vector<1x16xi1>, vector<1x16xf32>
    %cst_42 = arith.constant dense<0xFF800000> : vector<16xf32>
    %186 = vector.multi_reduction <maximumf>, %185, %cst_42 [0] : vector<1x16xf32> to vector<16xf32>
    %187 = vector.shape_cast %186 : vector<16xf32> to vector<1x16xf32>
    %188 = vector.extract_strided_slice %119 {offsets = [57, 32], sizes = [1, 16], strides = [1, 1]} : vector<58x48xf32> to vector<1x16xf32>
    %cst_43 = arith.constant 0xFF800000 : f32
    %189 = vector.shape_cast %180 : vector<1x1xi1> to vector<1x1xi1>
    %190 = vector.broadcast %189 : vector<1x1xi1> to vector<1x16xi1>
    %191 = vector.broadcast %cst_43 : f32 to vector<1x16xf32>
    %192 = arith.select %190, %188, %191 : vector<1x16xi1>, vector<1x16xf32>
    %cst_44 = arith.constant dense<0xFF800000> : vector<16xf32>
    %193 = vector.multi_reduction <maximumf>, %192, %cst_44 [0] : vector<1x16xf32> to vector<16xf32>
    %194 = vector.shape_cast %193 : vector<16xf32> to vector<1x16xf32>
    %195 = tpu.concatenate %147, %170, %187, %154, %177, %194 in 0 : vector<1x16xf32>, vector<1x16xf32>, vector<1x16xf32>, vector<1x16xf32>, vector<1x16xf32>, vector<1x16xf32> -> vector<6x16xf32>
    %c2 = arith.constant 2 : index
    %c0_45 = arith.constant 0 : index
    %196 = vector.load %arg3[%c2, %c0_45] : memref<8x128xf32, #tpu.memory_space<vmem>>, vector<6x16xf32>
    %197 = arith.mulf %195, %196 : vector<6x16xf32>
    %cst_46 = arith.constant dense<0.000000e+00> : vector<6xf32>
    %198 = vector.multi_reduction <add>, %197, %cst_46 [1] : vector<6x16xf32> to vector<6xf32>
    %199 = vector.shape_cast %198 : vector<6xf32> to vector<6x1xf32>
    %cst_47 = arith.constant 0.000000e+00 : f32
    %200 = vector.broadcast %cst_47 : f32 to vector<6x1xf32>
    %201 = arith.subf %200, %199 : vector<6x1xf32>
    %202 = math.exp %201 : vector<6x1xf32>
    %cst_48 = arith.constant 1.000000e+00 : f32
    %203 = vector.broadcast %cst_48 : f32 to vector<6x1xf32>
    %204 = arith.addf %203, %202 : vector<6x1xf32>
    %cst_49 = arith.constant 1.000000e+00 : f32
    %205 = vector.broadcast %cst_49 : f32 to vector<6x1xf32>
    %206 = arith.divf %205, %204 : vector<6x1xf32>
    %cst_50 = arith.constant 0.000000e+00 : f32
    %207 = vector.broadcast %cst_50 : f32 to vector<2x1xf32>
    %208 = tpu.concatenate %206, %207 in 0 : vector<6x1xf32>, vector<2x1xf32> -> vector<8x1xf32>
    %209 = vector.shape_cast %208 : vector<8x1xf32> to vector<8x1xf32>
    %210 = vector.broadcast %209 : vector<8x1xf32> to vector<8x128xf32>
    %c0_51 = arith.constant 0 : index
    %c0_52 = arith.constant 0 : index
    %211 = vector.load %arg4[%c0_51, %c0_52] : memref<8x128xf32, #tpu.memory_space<vmem>>, vector<8x128xf32>
    tpu.vector_store %arg4[%c0_51, %c0_52], %210 {strides = array<i32>} : memref<8x128xf32, #tpu.memory_space<vmem>>, vector<8x128xf32>,
    return
  }
}

</mosaic_0001>

<llo_original>
// kernel: squeeze.101
$region0: #{squeeze.101}
  %s0 = inlined_call_operand.vmem [shape: f32[6], index: 0, kind: input, shape index: {}]
  %s1 = inlined_call_operand.vmem [shape: f32[2,3], index: 1, kind: output, shape index: {}]
  $region1: #{squeeze.101} parent=0
    #allocation0 [shape = 'u8[4096]{0}', space=vmem, size = 0x1000, scoped, tag = 'scoped mem for output reshape']
    #allocation1 [shape = 'u8[4096]{0}', space=vmem, size = 0x1000, scoped, tag = 'scoped mem for input reshape']
    %s3 = sshll.u32 1, 1
    %s4 = ssub.s32 %s3, 1
    %v5 = vld [vmem:[%s0] sm:%s4]
    %6 = vst [vmem:[#allocation1] sm:%s4] %v5
    %v7 = vld [vmem:[#allocation1] sm:$0x1]
    %vm8 = vcmask 23552
    %9 = vst.msk [vmem:[#allocation0] sm:$0x1] %vm8, %v7
    %v10 = vld [vmem:[#allocation1] sm:$0x1]
    %11 = vrot.lane.b32.xlu0 %v10, 125
    %v12 = vpop.permute.xlu0 %11
    %vm13 = vcmask 23552
    %s14 = scalar_lea.vmem [#allocation0], 1
    %15 = vst.msk [vmem:[%s14] sm:$0x1] %vm13, %v12
    %s17 = sshll.u32 1, 2
    %s18 = ssub.s32 %s17, 1
    %v20 = vld [vmem:[#allocation0] sm:%s18]
    %s21 = sshll.u32 1, 2
    %s22 = ssub.s32 %s21, 1
    %23 = vst [vmem:[%s1] sm:%s22] %v20

// kernel: multiscale_forward.1
$region0: #{multiscale_forward.1}
  #allocation0 [shape = 'u32[]', space=smem, size = 0x4, offset = 0x4, fixed_abs, tag = 'smem constant byte address 0x4 - core index']
  #allocation1 [shape = 'u32[144,128]{1,0:T(1,128)}', space=vmem, size = 0x12000, scoped, tag = 'internal scratch']
  %s0 = inlined_call_operand.vmem [shape: f32[48,144], index: 0, kind: input, shape index: {}]
  %s1 = inlined_call_operand.vmem [shape: f32[144,96], index: 1, kind: input, shape index: {}]
  %s2 = inlined_call_operand.vmem [shape: f32[288,48], index: 2, kind: input, shape index: {}]
  %s3 = inlined_call_operand.vmem [shape: f32[8,128], index: 3, kind: input, shape index: {}]
  %s4 = inlined_call_operand.vmem [shape: f32[8,128], index: 4, kind: output, shape index: {}]
  %s5 = sld [smem:[#allocation0]]
  $region26: #{multiscale_forward.1} parent=0
    _
  %s7 = ssub.s32 1, %s5
  %s8 = scalar_select 0, %s7, %s5
  // Predicated region
  $region2: #{multiscale_forward.1} parent=0 // pred_check
    _
  $region3: #{multiscale_forward.1} parent=0 // pred_check_branch
    %10 = sbr.rel (0) target = $region5
  $region4: #{multiscale_forward.1} parent=0 // pred_region
    _
  $region5: #{multiscale_forward.1} parent=0 // pred_fallthru
    _
  // Predicated region
  $region6: #{multiscale_forward.1} parent=0 // pred_check
    _
  $region7: #{multiscale_forward.1} parent=0 // pred_check_branch
    %12 = sbr.rel (0) target = $region9
  $region8: #{multiscale_forward.1} parent=0 // pred_region
    _
  $region9: #{multiscale_forward.1} parent=0 // pred_fallthru
    _
  // Predicated region
  $region10: #{multiscale_forward.1} parent=0 // pred_check
    _
  $region11: #{multiscale_forward.1} parent=0 // pred_check_branch
    %14 = sbr.rel (0) target = $region13
  $region12: #{multiscale_forward.1} parent=0 // pred_region
    _
  $region13: #{multiscale_forward.1} parent=0 // pred_fallthru
    _
  // Predicated region
  $region14: #{multiscale_forward.1} parent=0 // pred_check
    _
  $region15: #{multiscale_forward.1} parent=0 // pred_check_branch
    %16 = sbr.rel (0) target = $region17
  $region16: #{multiscale_forward.1} parent=0 // pred_region
    _
  $region17: #{multiscale_forward.1} parent=0 // pred_fallthru
    _
  %v17 = vld [vmem:[%s3] sm:$0x1]
  %v18 = vld [vmem:[%s0] sm:$0xff]
  %v19 = vld [vmem:[%s0 + $0x8] sm:$0xff]
  %v20 = vld [vmem:[%s0 + $0x10] sm:$0xff]
  %v21 = vld [vmem:[%s0 + $0x18] sm:$0xff]
  %v22 = vld [vmem:[%s0 + $0x20] sm:$0xff]
  %v23 = vld [vmem:[%s0 + $0x28] sm:$0xff]
  %v24 = vld [vmem:[%s0 + $0x30] sm:$0xff]
  %v25 = vld [vmem:[%s0 + $0x38] sm:$0xff]
  %v26 = vld [vmem:[%s0 + $0x40] sm:$0xff]
  %v27 = vld [vmem:[%s0 + $0x48] sm:$0xff]
  %v28 = vld [vmem:[%s0 + $0x50] sm:$0xff]
  %v29 = vld [vmem:[%s0 + $0x58] sm:$0xff]
  %v30 = vld [vmem:[%s1] sm:$0xff]
  %v31 = vld [vmem:[%s1 + $0x8] sm:$0xff]
  %v32 = vld [vmem:[%s1 + $0x10] sm:$0xff]
  %v33 = vld [vmem:[%s1 + $0x18] sm:$0xff]
  %v34 = vld [vmem:[%s1 + $0x20] sm:$0xff]
  %v35 = vld [vmem:[%s1 + $0x28] sm:$0xff]
  %v36 = vld [vmem:[%s1 + $0x30] sm:$0xff]
  %v37 = vld [vmem:[%s1 + $0x38] sm:$0xff]
  %v38 = vld [vmem:[%s1 + $0x40] sm:$0xff]
  %v39 = vld [vmem:[%s1 + $0x48] sm:$0xff]
  %v40 = vld [vmem:[%s1 + $0x50] sm:$0xff]
  %v41 = vld [vmem:[%s1 + $0x58] sm:$0xff]
  %v42 = vld [vmem:[%s1 + $0x60] sm:$0xff]
  %v43 = vld [vmem:[%s1 + $0x68] sm:$0xff]
  %v44 = vld [vmem:[%s1 + $0x70] sm:$0xff]
  %v45 = vld [vmem:[%s1 + $0x78] sm:$0xff]
  %v46 = vld [vmem:[%s1 + $0x80] sm:$0xff]
  %v47 = vld [vmem:[%s1 + $0x88] sm:$0xff]
  %v48 = vlaneseq
  %v49 = vshrl.u32 %v48, 7
  %v50 = vsub.s32 0, %v49
  %v51 = vrot.slane %v17, %v50
  %vm52 = vcmask 130048
  %v54 = vsel %vm52, %v19, 0
  %v57 = vsel %vm52, %v21, 0
  %v60 = vsel %vm52, %v23, 0
  %v63 = vsel %vm52, %v25, 0
  %v66 = vsel %vm52, %v27, 0
  %v69 = vsel %vm52, %v29, 0
  %71 = vmatprep.subr.mxu0 0.0
  %72 = vmatpush1.msra.mxu0 %v45
  %73 = vmatprep.subr.mxu0 0.0
  %74 = vmatpush1.msra.mxu0 %v44
  %75 = vmatprep.subr.mxu0 0.0
  %76 = vmatpush1.msra.mxu0 %v43
  %77 = vmatprep.subr.mxu0 0.0
  %78 = vmatpush1.msra.mxu0 %v42
  %79 = vmatprep.subr.mxu0 0.0
  %80 = vmatpush1.msra.mxu0 %v41
  %81 = vmatprep.subr.mxu0 0.0
  %82 = vmatpush1.msra.mxu0 %v40
  %83 = vmatprep.subr.mxu0 0.0
  %84 = vmatpush1.msra.mxu0 %v39
  %85 = vmatprep.subr.mxu0 0.0
  %86 = vmatpush1.msra.mxu0 %v38
  %87 = vmatprep.subr.mxu0 0.0
  %88 = vmatpush1.msra.mxu0 %v37
  %89 = vmatprep.subr.mxu0 0.0
  %90 = vmatpush1.msra.mxu0 %v36
  %91 = vmatprep.subr.mxu0 0.0
  %92 = vmatpush1.msra.mxu0 %v35
  %93 = vmatprep.subr.mxu0 0.0
  %94 = vmatpush1.msra.mxu0 %v34
  %95 = vmatprep.subr.mxu0 0.0
  %96 = vmatpush1.msra.mxu0 %v33
  %97 = vmatprep.subr.mxu0 0.0
  %98 = vmatpush1.msra.mxu0 %v32
  %99 = vmatprep.subr.mxu0 0.0
  %100 = vmatpush1.msra.mxu0 %v31
  %101 = vmatprep.subr.mxu0 0.0
  %102 = vmatpush1.msra.mxu0 %v30
  %103 = vmatprep.subr.mxu0 0.0
  %104 = vmatpush2.msra.mxu0 0.0
  %105 = vmatprep.subr.mxu0 0.0
  %106 = vmatpush2.msra.mxu0 0.0
  %107 = vmatprep.subr.mxu0 0.0
  %108 = vmatpush2.msra.mxu0 0.0
  %109 = vmatprep.subr.mxu0 0.0
  %110 = vmatpush2.msra.mxu0 0.0
  %111 = vmatprep.subr.mxu0 0.0
  %112 = vmatpush2.msra.mxu0 0.0
  %113 = vmatprep.subr.mxu0 0.0
  %114 = vmatpush2.msra.mxu0 0.0
  %115 = vmatprep.subr.mxu0 0.0
  %116 = vmatpush2.msra.mxu0 0.0
  %117 = vmatprep.subr.mxu0 0.0
  %118 = vmatpush2.msra.mxu0 0.0
  %119 = vmatprep.subr.mxu0 0.0
  %120 = vmatpush2.msra.mxu0 0.0
  %121 = vmatprep.subr.mxu0 0.0
  %122 = vmatpush2.msra.mxu0 0.0
  %123 = vmatprep.subr.mxu0 0.0
  %124 = vmatpush2.msra.mxu0 0.0
  %125 = vmatprep.subr.mxu0 0.0
  %126 = vmatpush2.msra.mxu0 0.0
  %127 = vmatprep.subr.mxu0 0.0
  %128 = vmatpush2.msra.mxu0 0.0
  %129 = vmatprep.subr.mxu0 0.0
  %130 = vmatpush2.msra.mxu0 0.0
  %131 = vmatprep.subr.mxu0 0.0
  %132 = vmatpush2.msra.mxu0 %v47
  %133 = vmatprep.subr.mxu0 0.0
  %134 = vmatpush2.msra.mxu0 %v46
  %135 = vmatprep.mubr.f32.mxu0 %v54
  %136 = vmatmul.mubr.f32.gmra.mxu0 %v18
  %v137 = vpop.f32.mrf.mxu0
  %v138 = vadd.f32 %v51, %v137
  %v139 = vpop.f32.mrf.mxu0
  %140 = vmatprep.mubr.f32.mxu0 %v57
  %141 = vmatmul.mubr.f32.gmra.mxu0 %v20
  %v142 = vpop.f32.mrf.mxu0
  %v143 = vadd.f32 %v51, %v142
  %v144 = vpop.f32.mrf.mxu0
  %145 = vmatprep.mubr.f32.mxu0 %v60
  %146 = vmatmul.mubr.f32.gmra.mxu0 %v22
  %v147 = vpop.f32.mrf.mxu0
  %v148 = vadd.f32 %v51, %v147
  %v149 = vpop.f32.mrf.mxu0
  %150 = vmatprep.mubr.f32.mxu0 %v63
  %151 = vmatmul.mubr.f32.gmra.mxu0 %v24
  %v152 = vpop.f32.mrf.mxu0
  %v153 = vadd.f32 %v51, %v152
  %v154 = vpop.f32.mrf.mxu0
  %155 = vmatprep.mubr.f32.mxu0 %v66
  %156 = vmatmul.mubr.f32.gmra.mxu0 %v26
  %v157 = vpop.f32.mrf.mxu0
  %v158 = vadd.f32 %v51, %v157
  %v159 = vpop.f32.mrf.mxu0
  %160 = vmatprep.mubr.f32.mxu0 %v69
  %161 = vmatmul.mubr.f32.gmra.mxu0 %v28
  %v162 = vpop.f32.mrf.mxu0
  %v163 = vadd.f32 %v51, %v162
  %v164 = vpop.f32.mrf.mxu0
  %165 = vdwg.mxu0
  %vm166 = vcmp.ge.f32.partialorder %v138, 0.0
  %vm167 = vcmp.ge.f32.partialorder %v143, 0.0
  %vm168 = vcmp.ge.f32.partialorder %v148, 0.0
  %vm169 = vcmp.ge.f32.partialorder %v153, 0.0
  %vm170 = vcmp.ge.f32.partialorder %v158, 0.0
  %vm171 = vcmp.ge.f32.partialorder %v163, 0.0
  %v172 = vmul.f32 %v138, 0.2
  %v173 = vmul.f32 %v143, 0.2
  %v174 = vmul.f32 %v148, 0.2
  %v175 = vmul.f32 %v153, 0.2
  %v176 = vmul.f32 %v158, 0.2
  %v177 = vmul.f32 %v163, 0.2
  %v178 = vsel %vm166, %v138, %v172
  %v179 = vsel %vm167, %v143, %v173
  %v180 = vsel %vm168, %v148, %v174
  %v181 = vsel %vm169, %v153, %v175
  %v182 = vsel %vm170, %v158, %v176
  %v183 = vsel %vm171, %v163, %v177
  %v185 = vrot.slane %v178, 1
  %v187 = vrot.slane %v178, 7
  %v190 = vrot.slane %v179, 5
  %v192 = vrot.slane %v179, 3
  %vm194 = vcmask 1046528
  %v195 = vsel %vm194, 0.0, %v185
  %vm196 = vcmask 1042432
  %v197 = vsel %vm196, %v185, 0.0
  %vm198 = vcmask 1044480
  %v199 = vsel %vm198, %v197, %v187
  %vm200 = vcmask 1040384
  %v201 = vsel %vm200, %v187, 0.0
  %v202 = vsel %vm196, %v201, %v190
  %v203 = vsel %vm194, %v202, 0.0
  %v204 = vsel %vm200, 0.0, %v192
  %v205 = vsel %vm198, %v204, 0.0
  %v207 = vrot.slane %v180, 1
  %v209 = vrot.slane %v180, 7
  %v212 = vrot.slane %v181, 5
  %v214 = vrot.slane %v181, 3
  %v216 = vsel %vm194, 0.0, %v207
  %v217 = vsel %vm196, %v207, 0.0
  %v218 = vsel %vm198, %v217, %v209
  %v219 = vsel %vm200, %v209, 0.0
  %v220 = vsel %vm196, %v219, %v212
  %v221 = vsel %vm194, %v220, 0.0
  %v222 = vsel %vm200, 0.0, %v214
  %v223 = vsel %vm198, %v222, 0.0
  %v225 = vrot.slane %v182, 3
  %226 = vrot.lane.b32.xlu0 %v225, 96
  %v227 = vpop.permute.xlu0 %226
  %v229 = vrot.slane %v182, 1
  %230 = vrot.lane.b32.xlu0 %v229, 96
  %v231 = vpop.permute.xlu0 %230
  %v233 = vsel %vm198, 0.0, %v227
  %v234 = vsel %vm194, %v233, 0.0
  %v235 = vsel %vm200, 0.0, %v231
  %v236 = vsel %vm196, %v235, 0.0
  %v237 = vrot.slane %v182, 7
  %238 = vrot.lane.b32.xlu0 %v237, 96
  %v239 = vpop.permute.xlu0 %238
  %v241 = vrot.slane %v182, 5
  %242 = vrot.lane.b32.xlu0 %v241, 96
  %v243 = vpop.permute.xlu0 %242
  %v245 = vsel %vm198, 0.0, %v239
  %v246 = vsel %vm194, %v245, 0.0
  %v247 = vsel %vm200, 0.0, %v243
  %v248 = vsel %vm196, %v247, 0.0
  %v250 = vrot.slane %v183, 4
  %251 = vrot.lane.b32.xlu0 %v250, 64
  %v252 = vpop.permute.xlu0 %251
  %vm254 = vcmask 1043456
  %v255 = vsel %vm254, 0.0, %v252
  %v256 = vsel %vm198, %v255, 0.0
  %v257 = vrot.slane %v183, 5
  %258 = vrot.lane.b32.xlu0 %v257, 64
  %v259 = vpop.permute.xlu0 %258
  %v261 = vsel %vm254, 0.0, %v259
  %v262 = vsel %vm198, %v261, 0.0
  %vm266 = vcmask 1045504
  %v267 = vrot.slane %v216, 2
  %v268 = vrot.slane %v218, 2
  %v269 = vsel %vm266, %v267, %v268
  %v270 = vrot.slane %v221, 2
  %v271 = vsel %vm266, %v268, %v270
  %v277 = vrot.slane %v234, 4
  %v280 = vrot.slane %v246, 6
  %v283 = vrot.slane %v262, 7
  %v285 = vsel %vm266, %v203, %v267
  %v286 = vsel %vm254, %v270, %v277
  %vm287 = vcmask 1041408
  %v288 = vsel %vm287, %v277, %v280
  %v289 = vsel %vm200, %v256, %v283
  %v293 = vrot.slane %v195, 1
  %v294 = vrot.slane %v199, 1
  %v295 = vsel %vm194, %v293, %v294
  %v296 = vrot.slane %v203, 1
  %v297 = vsel %vm194, %v294, %v296
  %v299 = vrot.slane %v216, 3
  %v300 = vrot.slane %v218, 3
  %v301 = vsel %vm198, %v299, %v300
  %v302 = vrot.slane %v221, 3
  %v303 = vsel %vm198, %v300, %v302
  %v306 = vrot.slane %v234, 5
  %v308 = vrot.slane %v246, 7
  %v311 = vrot.slane %v256, 1
  %v313 = vsel %vm266, %v296, %v299
  %v314 = vsel %vm254, %v302, %v306
  %v315 = vsel %vm287, %v306, %v308
  %v316 = vsel %vm200, %v311, %v262
  %v317 = vrot.slane %v195, 2
  %v318 = vrot.slane %v199, 2
  %v319 = vsel %vm266, %v317, %v318
  %v320 = vrot.slane %v203, 2
  %v321 = vsel %vm266, %v318, %v320
  %v323 = vrot.slane %v216, 4
  %v324 = vrot.slane %v218, 4
  %v325 = vsel %vm254, %v323, %v324
  %v326 = vrot.slane %v221, 4
  %v327 = vsel %vm254, %v324, %v326
  %v330 = vrot.slane %v234, 6
  %v332 = vrot.slane %v256, 2
  %v334 = vrot.slane %v262, 1
  %v336 = vsel %vm266, %v320, %v323
  %v337 = vsel %vm254, %v326, %v330
  %v338 = vsel %vm287, %v330, %v246
  %v339 = vsel %vm200, %v332, %v334
  %v341 = vrot.slane %v195, 6
  %v342 = vrot.slane %v199, 6
  %v343 = vsel %vm287, %v341, %v342
  %v344 = vrot.slane %v203, 6
  %v345 = vsel %vm287, %v342, %v344
  %v346 = vrot.slane %v205, 6
  %v347 = vsel %vm287, %v344, %v346
  %v350 = vrot.slane %v246, 2
  %v351 = vrot.slane %v248, 2
  %v352 = vsel %vm266, %v350, %v351
  %v354 = vrot.slane %v256, 3
  %v356 = vrot.slane %v262, 2
  %v358 = vsel %vm266, %v347, %v216
  %v359 = vsel %vm254, %v223, %v234
  %v360 = vsel %vm287, %v236, %v352
  %v361 = vsel %vm200, %v354, %v356
  %v362 = vrot.slane %v195, 7
  %v363 = vrot.slane %v199, 7
  %v364 = vsel %vm200, %v362, %v363
  %v365 = vrot.slane %v203, 7
  %v366 = vsel %vm200, %v363, %v365
  %v367 = vrot.slane %v205, 7
  %v368 = vsel %vm200, %v365, %v367
  %v373 = vrot.slane %v216, 1
  %v374 = vrot.slane %v218, 1
  %v375 = vsel %vm194, %v373, %v374
  %v376 = vrot.slane %v221, 1
  %v377 = vsel %vm194, %v374, %v376
  %v378 = vrot.slane %v223, 1
  %v379 = vsel %vm194, %v376, %v378
  %v385 = vrot.slane %v234, 1
  %v386 = vrot.slane %v236, 1
  %v387 = vsel %vm194, %v385, %v386
  %v390 = vrot.slane %v246, 3
  %v391 = vrot.slane %v248, 3
  %v392 = vsel %vm198, %v390, %v391
  %v394 = vrot.slane %v256, 4
  %v396 = vrot.slane %v262, 3
  %v398 = vsel %vm266, %v368, %v375
  %v399 = vsel %vm254, %v378, %v387
  %v400 = vsel %vm287, %v386, %v392
  %v401 = vsel %vm200, %v394, %v396
  %v402 = vrot.slane %v223, 2
  %v403 = vsel %vm266, %v270, %v402
  %v406 = vrot.slane %v234, 2
  %v407 = vrot.slane %v236, 2
  %v408 = vsel %vm266, %v406, %v407
  %v411 = vrot.slane %v246, 4
  %v412 = vrot.slane %v248, 4
  %v413 = vsel %vm254, %v411, %v412
  %v415 = vrot.slane %v256, 5
  %v417 = vrot.slane %v262, 4
  %v419 = vsel %vm266, %v205, %v268
  %v420 = vsel %vm254, %v402, %v408
  %v421 = vsel %vm287, %v407, %v413
  %v422 = vsel %vm200, %v415, %v417
  %v424 = vrot.slane %v199, 4
  %v425 = vrot.slane %v203, 4
  %v426 = vsel %vm254, %v424, %v425
  %v427 = vrot.slane %v205, 4
  %v428 = vsel %vm254, %v425, %v427
  %v429 = vrot.slane 0.0, 4
  %v430 = vsel %vm254, %v427, %v429
  %v432 = vrot.slane %v218, 6
  %v433 = vrot.slane %v221, 6
  %v434 = vsel %vm287, %v432, %v433
  %v435 = vrot.slane %v223, 6
  %v436 = vsel %vm287, %v433, %v435
  %v437 = vrot.slane 0.0, 6
  %v438 = vsel %vm287, %v435, %v437
  %v441 = vrot.slane %v236, 4
  %v443 = vrot.slane %v248, 6
  %v445 = vrot.slane %v256, 6
  %v447 = vrot.slane %v262, 5
  %v449 = vsel %vm266, %v430, %v432
  %v450 = vsel %vm254, %v438, %v441
  %v451 = vsel %vm287, %v441, %v443
  %v452 = vsel %vm200, %v445, %v447
  %v453 = vrot.slane %v199, 5
  %v454 = vrot.slane %v203, 5
  %v455 = vsel %vm196, %v453, %v454
  %v456 = vrot.slane %v205, 5
  %v457 = vsel %vm196, %v454, %v456
  %v458 = vrot.slane 0.0, 5
  %v459 = vsel %vm196, %v456, %v458
  %v461 = vrot.slane %v218, 7
  %v462 = vrot.slane %v221, 7
  %v463 = vsel %vm200, %v461, %v462
  %v464 = vrot.slane %v223, 7
  %v465 = vsel %vm200, %v462, %v464
  %v466 = vrot.slane 0.0, 7
  %v467 = vsel %vm200, %v464, %v466
  %v470 = vrot.slane %v236, 5
  %v472 = vrot.slane %v248, 7
  %v474 = vrot.slane %v256, 7
  %v476 = vrot.slane %v262, 6
  %v478 = vsel %vm266, %v459, %v461
  %v479 = vsel %vm254, %v467, %v470
  %v480 = vsel %vm287, %v470, %v472
  %v481 = vsel %vm200, %v474, %v476
  %v482 = vsel %vm287, %v346, %v437
  %v484 = vrot.slane %v236, 6
  %v487 = vsel %vm266, %v482, %v218
  %v488 = vsel %vm254, 0.0, %v484
  %v489 = vsel %vm287, %v484, %v248
  %v490 = vsel %vm200, 0.0, %v466
  %495 = vrot.lane.b32.xlu0 %v295, 32
  %v496 = vpop.permute.xlu0 %495
  %497 = vrot.lane.b32.xlu0 %v297, 32
  %v498 = vpop.permute.xlu0 %497
  %499 = vrot.lane.b32.xlu0 %v313, 32
  %v500 = vpop.permute.xlu0 %499
  %501 = vrot.lane.b32.xlu0 %v301, 32
  %v502 = vpop.permute.xlu0 %501
  %503 = vrot.lane.b32.xlu0 %v303, 32
  %v504 = vpop.permute.xlu0 %503
  %505 = vrot.lane.b32.xlu0 %v314, 32
  %v506 = vpop.permute.xlu0 %505
  %507 = vrot.lane.b32.xlu0 %v315, 32
  %v508 = vpop.permute.xlu0 %507
  %509 = vrot.lane.b32.xlu0 %v316, 32
  %v510 = vpop.permute.xlu0 %509
  %523 = vrot.lane.b32.xlu0 %v319, 64
  %v524 = vpop.permute.xlu0 %523
  %525 = vrot.lane.b32.xlu0 %v321, 64
  %v526 = vpop.permute.xlu0 %525
  %527 = vrot.lane.b32.xlu0 %v336, 64
  %v528 = vpop.permute.xlu0 %527
  %529 = vrot.lane.b32.xlu0 %v325, 64
  %v530 = vpop.permute.xlu0 %529
  %531 = vrot.lane.b32.xlu0 %v327, 64
  %v532 = vpop.permute.xlu0 %531
  %533 = vrot.lane.b32.xlu0 %v337, 64
  %v534 = vpop.permute.xlu0 %533
  %535 = vrot.lane.b32.xlu0 %v338, 64
  %v536 = vpop.permute.xlu0 %535
  %537 = vrot.lane.b32.xlu0 %v339, 64
  %v538 = vpop.permute.xlu0 %537
  %551 = vrot.lane.b32.xlu0 %v343, 96
  %v552 = vpop.permute.xlu0 %551
  %553 = vrot.lane.b32.xlu0 %v345, 96
  %v554 = vpop.permute.xlu0 %553
  %555 = vrot.lane.b32.xlu0 %v358, 96
  %v556 = vpop.permute.xlu0 %555
  %557 = vrot.lane.b32.xlu0 %v218, 96
  %v558 = vpop.permute.xlu0 %557
  %559 = vrot.lane.b32.xlu0 %v221, 96
  %v560 = vpop.permute.xlu0 %559
  %561 = vrot.lane.b32.xlu0 %v359, 96
  %v562 = vpop.permute.xlu0 %561
  %563 = vrot.lane.b32.xlu0 %v360, 96
  %v564 = vpop.permute.xlu0 %563
  %565 = vrot.lane.b32.xlu0 %v361, 96
  %v566 = vpop.permute.xlu0 %565
  %579 = vrot.lane.b32.xlu0 %v199, 32
  %v580 = vpop.permute.xlu0 %579
  %581 = vrot.lane.b32.xlu0 %v203, 32
  %v582 = vpop.permute.xlu0 %581
  %583 = vrot.lane.b32.xlu0 %v419, 32
  %v584 = vpop.permute.xlu0 %583
  %585 = vrot.lane.b32.xlu0 %v271, 32
  %v586 = vpop.permute.xlu0 %585
  %587 = vrot.lane.b32.xlu0 %v403, 32
  %v588 = vpop.permute.xlu0 %587
  %589 = vrot.lane.b32.xlu0 %v420, 32
  %v590 = vpop.permute.xlu0 %589
  %591 = vrot.lane.b32.xlu0 %v421, 32
  %v592 = vpop.permute.xlu0 %591
  %593 = vrot.lane.b32.xlu0 %v422, 32
  %v594 = vpop.permute.xlu0 %593
  %607 = vrot.lane.b32.xlu0 %v426, 64
  %v608 = vpop.permute.xlu0 %607
  %609 = vrot.lane.b32.xlu0 %v428, 64
  %v610 = vpop.permute.xlu0 %609
  %611 = vrot.lane.b32.xlu0 %v449, 64
  %v612 = vpop.permute.xlu0 %611
  %613 = vrot.lane.b32.xlu0 %v434, 64
  %v614 = vpop.permute.xlu0 %613
  %615 = vrot.lane.b32.xlu0 %v436, 64
  %v616 = vpop.permute.xlu0 %615
  %617 = vrot.lane.b32.xlu0 %v450, 64
  %v618 = vpop.permute.xlu0 %617
  %619 = vrot.lane.b32.xlu0 %v451, 64
  %v620 = vpop.permute.xlu0 %619
  %621 = vrot.lane.b32.xlu0 %v452, 64
  %v622 = vpop.permute.xlu0 %621
  %635 = vrot.lane.b32.xlu0 %v455, 96
  %v636 = vpop.permute.xlu0 %635
  %637 = vrot.lane.b32.xlu0 %v457, 96
  %v638 = vpop.permute.xlu0 %637
  %639 = vrot.lane.b32.xlu0 %v478, 96
  %v640 = vpop.permute.xlu0 %639
  %641 = vrot.lane.b32.xlu0 %v463, 96
  %v642 = vpop.permute.xlu0 %641
  %643 = vrot.lane.b32.xlu0 %v465, 96
  %v644 = vpop.permute.xlu0 %643
  %645 = vrot.lane.b32.xlu0 %v479, 96
  %v646 = vpop.permute.xlu0 %645
  %647 = vrot.lane.b32.xlu0 %v480, 96
  %v648 = vpop.permute.xlu0 %647
  %649 = vrot.lane.b32.xlu0 %v481, 96
  %v650 = vpop.permute.xlu0 %649
  %vm659 = vcmask 261120
  %v660 = vsel %vm659, %v195, %v496
  %v661 = vsel %vm659, %v199, %v498
  %v662 = vsel %vm659, %v285, %v500
  %v663 = vsel %vm659, %v269, %v502
  %v664 = vsel %vm659, %v271, %v504
  %v665 = vsel %vm659, %v286, %v506
  %v666 = vsel %vm659, %v288, %v508
  %v667 = vsel %vm659, %v289, %v510
  %vm668 = vcmask 523264
  %v669 = vsel %vm668, %v660, %v524
  %v670 = vsel %vm668, %v661, %v526
  %v671 = vsel %vm668, %v662, %v528
  %v672 = vsel %vm668, %v663, %v530
  %v673 = vsel %vm668, %v664, %v532
  %v674 = vsel %vm668, %v665, %v534
  %v675 = vsel %vm668, %v666, %v536
  %v676 = vsel %vm668, %v667, %v538
  %vm677 = vcmask 785408
  %v678 = vsel %vm677, %v669, %v552
  %v679 = vsel %vm677, %v670, %v554
  %v680 = vsel %vm677, %v671, %v556
  %v681 = vsel %vm677, %v672, %v558
  %v682 = vsel %vm677, %v673, %v560
  %v683 = vsel %vm677, %v674, %v562
  %v684 = vsel %vm677, %v675, %v564
  %v685 = vsel %vm677, %v676, %v566
  %v686 = vsel %vm659, %v364, %v580
  %v687 = vsel %vm659, %v366, %v582
  %v688 = vsel %vm659, %v398, %v584
  %v689 = vsel %vm659, %v377, %v586
  %v690 = vsel %vm659, %v379, %v588
  %v691 = vsel %vm659, %v399, %v590
  %v692 = vsel %vm659, %v400, %v592
  %v693 = vsel %vm659, %v401, %v594
  %v694 = vsel %vm668, %v686, %v608
  %v695 = vsel %vm668, %v687, %v610
  %v696 = vsel %vm668, %v688, %v612
  %v697 = vsel %vm668, %v689, %v614
  %v698 = vsel %vm668, %v690, %v616
  %v699 = vsel %vm668, %v691, %v618
  %v700 = vsel %vm668, %v692, %v620
  %v701 = vsel %vm668, %v693, %v622
  %v702 = vsel %vm677, %v694, %v636
  %v703 = vsel %vm677, %v695, %v638
  %v704 = vsel %vm677, %v696, %v640
  %v705 = vsel %vm677, %v697, %v642
  %v706 = vsel %vm677, %v698, %v644
  %v707 = vsel %vm677, %v699, %v646
  %v708 = vsel %vm677, %v700, %v648
  %v709 = vsel %vm677, %v701, %v650
  %v710 = vld [vmem:[%s3 + $0x1] sm:$0x1]
  %v711 = vld [vmem:[%s2] sm:$0xff]
  %v712 = vld [vmem:[%s2 + $0x8] sm:$0xff]
  %v713 = vld [vmem:[%s2 + $0x10] sm:$0xff]
  %v714 = vld [vmem:[%s2 + $0x18] sm:$0xff]
  %v715 = vld [vmem:[%s2 + $0x20] sm:$0xff]
  %v716 = vld [vmem:[%s2 + $0x28] sm:$0xff]
  %v717 = vld [vmem:[%s2 + $0x30] sm:$0xff]
  %v718 = vld [vmem:[%s2 + $0x38] sm:$0xff]
  %v719 = vld [vmem:[%s2 + $0x40] sm:$0xff]
  %v720 = vld [vmem:[%s2 + $0x48] sm:$0xff]
  %v721 = vld [vmem:[%s2 + $0x50] sm:$0xff]
  %v722 = vld [vmem:[%s2 + $0x58] sm:$0xff]
  %v723 = vld [vmem:[%s2 + $0x60] sm:$0xff]
  %v724 = vld [vmem:[%s2 + $0x68] sm:$0xff]
  %v725 = vld [vmem:[%s2 + $0x70] sm:$0xff]
  %v726 = vld [vmem:[%s2 + $0x78] sm:$0xff]
  %v727 = vld [vmem:[%s2 + $0x80] sm:$0xff]
  %v728 = vld [vmem:[%s2 + $0x88] sm:$0xff]
  %v729 = vld [vmem:[%s2 + $0x90] sm:$0xff]
  %v730 = vld [vmem:[%s2 + $0x98] sm:$0xff]
  %v731 = vld [vmem:[%s2 + $0xa0] sm:$0xff]
  %v732 = vld [vmem:[%s2 + $0xa8] sm:$0xff]
  %v733 = vld [vmem:[%s2 + $0xb0] sm:$0xff]
  %v734 = vld [vmem:[%s2 + $0xb8] sm:$0xff]
  %v735 = vld [vmem:[%s2 + $0xc0] sm:$0xff]
  %v736 = vld [vmem:[%s2 + $0xc8] sm:$0xff]
  %v737 = vld [vmem:[%s2 + $0xd0] sm:$0xff]
  %v738 = vld [vmem:[%s2 + $0xd8] sm:$0xff]
  %v739 = vld [vmem:[%s2 + $0xe0] sm:$0xff]
  %v740 = vld [vmem:[%s2 + $0xe8] sm:$0xff]
  %v741 = vld [vmem:[%s2 + $0xf0] sm:$0xff]
  %v742 = vld [vmem:[%s2 + $0xf8] sm:$0xff]
  %v743 = vld [vmem:[%s2 + $0x100] sm:$0xff]
  %v744 = vld [vmem:[%s2 + $0x108] sm:$0xff]
  %v745 = vld [vmem:[%s2 + $0x110] sm:$0xff]
  %v746 = vld [vmem:[%s2 + $0x118] sm:$0xff]
  %v747 = vlaneseq
  %v748 = vshrl.u32 %v747, 7
  %v749 = vsub.s32 0, %v748
  %v750 = vrot.slane %v710, %v749
  %v751 = vsel %vm659, %v345, 0
  %v753 = vsel %vm659, %v347, 0
  %v756 = vsel %vm659, %v487, 0
  %v758 = vsel %vm659, %v221, 0
  %v760 = vsel %vm659, %v223, 0
  %v763 = vsel %vm659, %v488, 0
  %v766 = vsel %vm659, %v489, 0
  %v769 = vsel %vm659, %v490, 0
  %771 = vmatprep.subr.mxu0 0.0
  %772 = vmatpush1.msra.mxu0 %v726
  %773 = vmatprep.subr.mxu0 0.0
  %774 = vmatpush1.msra.mxu0 %v725
  %775 = vmatprep.subr.mxu0 0.0
  %776 = vmatpush1.msra.mxu0 %v724
  %777 = vmatprep.subr.mxu0 0.0
  %778 = vmatpush1.msra.mxu0 %v723
  %779 = vmatprep.subr.mxu0 0.0
  %780 = vmatpush1.msra.mxu0 %v722
  %781 = vmatprep.subr.mxu0 0.0
  %782 = vmatpush1.msra.mxu0 %v721
  %783 = vmatprep.subr.mxu0 0.0
  %784 = vmatpush1.msra.mxu0 %v720
  %785 = vmatprep.subr.mxu0 0.0
  %786 = vmatpush1.msra.mxu0 %v719
  %787 = vmatprep.subr.mxu0 0.0
  %788 = vmatpush1.msra.mxu0 %v718
  %789 = vmatprep.subr.mxu0 0.0
  %790 = vmatpush1.msra.mxu0 %v717
  %791 = vmatprep.subr.mxu0 0.0
  %792 = vmatpush1.msra.mxu0 %v716
  %793 = vmatprep.subr.mxu0 0.0
  %794 = vmatpush1.msra.mxu0 %v715
  %795 = vmatprep.subr.mxu0 0.0
  %796 = vmatpush1.msra.mxu0 %v714
  %797 = vmatprep.subr.mxu0 0.0
  %798 = vmatpush1.msra.mxu0 %v713
  %799 = vmatprep.subr.mxu0 0.0
  %800 = vmatpush1.msra.mxu0 %v712
  %801 = vmatprep.subr.mxu0 0.0
  %802 = vmatpush1.msra.mxu0 %v711
  %803 = vmatprep.subr.mxu0 0.0
  %804 = vmatpush2.msra.mxu0 %v742
  %805 = vmatprep.subr.mxu0 0.0
  %806 = vmatpush2.msra.mxu0 %v741
  %807 = vmatprep.subr.mxu0 0.0
  %808 = vmatpush2.msra.mxu0 %v740
  %809 = vmatprep.subr.mxu0 0.0
  %810 = vmatpush2.msra.mxu0 %v739
  %811 = vmatprep.subr.mxu0 0.0
  %812 = vmatpush2.msra.mxu0 %v738
  %813 = vmatprep.subr.mxu0 0.0
  %814 = vmatpush2.msra.mxu0 %v737
  %815 = vmatprep.subr.mxu0 0.0
  %816 = vmatpush2.msra.mxu0 %v736
  %817 = vmatprep.subr.mxu0 0.0
  %818 = vmatpush2.msra.mxu0 %v735
  %819 = vmatprep.subr.mxu0 0.0
  %820 = vmatpush2.msra.mxu0 %v734
  %821 = vmatprep.subr.mxu0 0.0
  %822 = vmatpush2.msra.mxu0 %v733
  %823 = vmatprep.subr.mxu0 0.0
  %824 = vmatpush2.msra.mxu0 %v732
  %825 = vmatprep.subr.mxu0 0.0
  %826 = vmatpush2.msra.mxu0 %v731
  %827 = vmatprep.subr.mxu0 0.0
  %828 = vmatpush2.msra.mxu0 %v730
  %829 = vmatprep.subr.mxu0 0.0
  %830 = vmatpush2.msra.mxu0 %v729
  %831 = vmatprep.subr.mxu0 0.0
  %832 = vmatpush2.msra.mxu0 %v728
  %833 = vmatprep.subr.mxu0 0.0
  %834 = vmatpush2.msra.mxu0 %v727
  %835 = vmatprep.mubr.f32.mxu0 %v702
  %836 = vmatmul.mubr.f32.gmra.mxu0 %v678
  %v837 = vpop.f32.mrf.mxu0
  %v838 = vadd.f32 %v750, %v837
  %v839 = vpop.f32.mrf.mxu0
  %840 = vmatprep.mubr.f32.mxu0 %v703
  %841 = vmatmul.mubr.f32.gmra.mxu0 %v679
  %v842 = vpop.f32.mrf.mxu0
  %v843 = vadd.f32 %v750, %v842
  %v844 = vpop.f32.mrf.mxu0
  %845 = vmatprep.mubr.f32.mxu0 %v704
  %846 = vmatmul.mubr.f32.gmra.mxu0 %v680
  %v847 = vpop.f32.mrf.mxu0
  %v848 = vadd.f32 %v750, %v847
  %v849 = vpop.f32.mrf.mxu0
  %850 = vmatprep.mubr.f32.mxu0 %v705
  %851 = vmatmul.mubr.f32.gmra.mxu0 %v681
  %v852 = vpop.f32.mrf.mxu0
  %v853 = vadd.f32 %v750, %v852
  %v854 = vpop.f32.mrf.mxu0
  %855 = vmatprep.mubr.f32.mxu0 %v706
  %856 = vmatmul.mubr.f32.gmra.mxu0 %v682
  %v857 = vpop.f32.mrf.mxu0
  %v858 = vadd.f32 %v750, %v857
  %v859 = vpop.f32.mrf.mxu0
  %860 = vmatprep.mubr.f32.mxu0 %v707
  %861 = vmatmul.mubr.f32.gmra.mxu0 %v683
  %v862 = vpop.f32.mrf.mxu0
  %v863 = vadd.f32 %v750, %v862
  %v864 = vpop.f32.mrf.mxu0
  %865 = vmatprep.mubr.f32.mxu0 %v708
  %866 = vmatmul.mubr.f32.gmra.mxu0 %v684
  %v867 = vpop.f32.mrf.mxu0
  %v868 = vadd.f32 %v750, %v867
  %v869 = vpop.f32.mrf.mxu0
  %870 = vmatprep.mubr.f32.mxu0 %v709
  %871 = vmatmul.mubr.f32.gmra.mxu0 %v685
  %v872 = vpop.f32.mrf.mxu0
  %v873 = vadd.f32 %v750, %v872
  %v874 = vpop.f32.mrf.mxu0
  %875 = vdwg.mxu0
  %876 = vmatprep.subr.mxu0 0.0
  %877 = vmatpush1.msra.mxu0 0.0
  %878 = vmatprep.subr.mxu0 0.0
  %879 = vmatpush1.msra.mxu0 0.0
  %880 = vmatprep.subr.mxu0 0.0
  %881 = vmatpush1.msra.mxu0 0.0
  %882 = vmatprep.subr.mxu0 0.0
  %883 = vmatpush1.msra.mxu0 0.0
  %884 = vmatprep.subr.mxu0 0.0
  %885 = vmatpush1.msra.mxu0 0.0
  %886 = vmatprep.subr.mxu0 0.0
  %887 = vmatpush1.msra.mxu0 0.0
  %888 = vmatprep.subr.mxu0 0.0
  %889 = vmatpush1.msra.mxu0 0.0
  %890 = vmatprep.subr.mxu0 0.0
  %891 = vmatpush1.msra.mxu0 0.0
  %892 = vmatprep.subr.mxu0 0.0
  %893 = vmatpush1.msra.mxu0 0.0
  %894 = vmatprep.subr.mxu0 0.0
  %895 = vmatpush1.msra.mxu0 0.0
  %896 = vmatprep.subr.mxu0 0.0
  %897 = vmatpush1.msra.mxu0 0.0
  %898 = vmatprep.subr.mxu0 0.0
  %899 = vmatpush1.msra.mxu0 0.0
  %900 = vmatprep.subr.mxu0 0.0
  %901 = vmatpush1.msra.mxu0 %v746
  %902 = vmatprep.subr.mxu0 0.0
  %903 = vmatpush1.msra.mxu0 %v745
  %904 = vmatprep.subr.mxu0 0.0
  %905 = vmatpush1.msra.mxu0 %v744
  %906 = vmatprep.subr.mxu0 0.0
  %907 = vmatpush1.msra.mxu0 %v743
  %908 = vmatprep.subr.mxu0 0.0
  %909 = vmatpush2.msra.mxu0 0.0
  %910 = vmatprep.subr.mxu0 0.0
  %911 = vmatpush2.msra.mxu0 0.0
  %912 = vmatprep.subr.mxu0 0.0
  %913 = vmatpush2.msra.mxu0 0.0
  %914 = vmatprep.subr.mxu0 0.0
  %915 = vmatpush2.msra.mxu0 0.0
  %916 = vmatprep.subr.mxu0 0.0
  %917 = vmatpush2.msra.mxu0 0.0
  %918 = vmatprep.subr.mxu0 0.0
  %919 = vmatpush2.msra.mxu0 0.0
  %920 = vmatprep.subr.mxu0 0.0
  %921 = vmatpush2.msra.mxu0 0.0
  %922 = vmatprep.subr.mxu0 0.0
  %923 = vmatpush2.msra.mxu0 0.0
  %924 = vmatprep.subr.mxu0 0.0
  %925 = vmatpush2.msra.mxu0 0.0
  %926 = vmatprep.subr.mxu0 0.0
  %927 = vmatpush2.msra.mxu0 0.0
  %928 = vmatprep.subr.mxu0 0.0
  %929 = vmatpush2.msra.mxu0 0.0
  %930 = vmatprep.subr.mxu0 0.0
  %931 = vmatpush2.msra.mxu0 0.0
  %932 = vmatprep.subr.mxu0 0.0
  %933 = vmatpush2.msra.mxu0 0.0
  %934 = vmatprep.subr.mxu0 0.0
  %935 = vmatpush2.msra.mxu0 0.0
  %936 = vmatprep.subr.mxu0 0.0
  %937 = vmatpush2.msra.mxu0 0.0
  %938 = vmatprep.subr.mxu0 0.0
  %939 = vmatpush2.msra.mxu0 0.0
  %940 = vmatprep.mubr.f32.mxu0 0.0
  %941 = vmatmul.mubr.f32.gmra.mxu0 %v751
  %v942 = vpop.f32.mrf.mxu0
  %v943 = vadd.f32 %v838, %v942
  %v944 = vpop.f32.mrf.mxu0
  %945 = vmatprep.mubr.f32.mxu0 0.0
  %946 = vmatmul.mubr.f32.gmra.mxu0 %v753
  %v947 = vpop.f32.mrf.mxu0
  %v948 = vadd.f32 %v843, %v947
  %v949 = vpop.f32.mrf.mxu0
  %950 = vmatprep.mubr.f32.mxu0 0.0
  %951 = vmatmul.mubr.f32.gmra.mxu0 %v756
  %v952 = vpop.f32.mrf.mxu0
  %v953 = vadd.f32 %v848, %v952
  %v954 = vpop.f32.mrf.mxu0
  %955 = vmatprep.mubr.f32.mxu0 0.0
  %956 = vmatmul.mubr.f32.gmra.mxu0 %v758
  %v957 = vpop.f32.mrf.mxu0
  %v958 = vadd.f32 %v853, %v957
  %v959 = vpop.f32.mrf.mxu0
  %960 = vmatprep.mubr.f32.mxu0 0.0
  %961 = vmatmul.mubr.f32.gmra.mxu0 %v760
  %v962 = vpop.f32.mrf.mxu0
  %v963 = vadd.f32 %v858, %v962
  %v964 = vpop.f32.mrf.mxu0
  %965 = vmatprep.mubr.f32.mxu0 0.0
  %966 = vmatmul.mubr.f32.gmra.mxu0 %v763
  %v967 = vpop.f32.mrf.mxu0
  %v968 = vadd.f32 %v863, %v967
  %v969 = vpop.f32.mrf.mxu0
  %970 = vmatprep.mubr.f32.mxu0 0.0
  %971 = vmatmul.mubr.f32.gmra.mxu0 %v766
  %v972 = vpop.f32.mrf.mxu0
  %v973 = vadd.f32 %v868, %v972
  %v974 = vpop.f32.mrf.mxu0
  %975 = vmatprep.mubr.f32.mxu0 0.0
  %976 = vmatmul.mubr.f32.gmra.mxu0 %v769
  %v977 = vpop.f32.mrf.mxu0
  %v978 = vadd.f32 %v873, %v977
  %v979 = vpop.f32.mrf.mxu0
  %980 = vdwg.mxu0
  %v981 = vlaneseq
  %v982 = vshrl.u32 %v981, 7
  %v983 = vadd.s32 %v982, 8
  %v984 = vadd.s32 %v982, 16
  %vm985 = vcmp.lt.s32.totalorder %v982, 4
  %vm986 = vcmp.lt.s32.totalorder %v983, 4
  %vm987 = vcmp.lt.s32.totalorder %v984, 4
  %vm988 = vcmp.ge.s32.totalorder %v982, 6
  %vm989 = vcmp.ge.s32.totalorder %v983, 6
  %vm990 = vcmp.ge.s32.totalorder %v984, 6
  %vm991 = vcmp.lt.s32.totalorder %v982, 10
  %vm992 = vcmp.lt.s32.totalorder %v983, 10
  %vm993 = vcmp.lt.s32.totalorder %v984, 10
  %vm994 = vmand %vm988, %vm991
  %vm995 = vmand %vm989, %vm992
  %vm996 = vmand %vm990, %vm993
  %vm997 = vmor %vm985, %vm994
  %vm998 = vmor %vm986, %vm995
  %vm999 = vmor %vm987, %vm996
  %vm1000 = vcmp.ge.s32.totalorder %v982, 12
  %vm1001 = vcmp.ge.s32.totalorder %v983, 12
  %vm1002 = vcmp.ge.s32.totalorder %v984, 12
  %vm1003 = vcmp.lt.s32.totalorder %v982, 16
  %vm1004 = vcmp.lt.s32.totalorder %v983, 16
  %vm1005 = vcmp.lt.s32.totalorder %v984, 16
  %vm1006 = vmand %vm1000, %vm1003
  %vm1007 = vmand %vm1001, %vm1004
  %vm1008 = vmand %vm1002, %vm1005
  %vm1009 = vmor %vm997, %vm1006
  %vm1010 = vmor %vm998, %vm1007
  %vm1011 = vmor %vm999, %vm1008
  %vm1012 = vcmp.ge.s32.totalorder %v982, 18
  %vm1013 = vcmp.ge.s32.totalorder %v983, 18
  %vm1014 = vcmp.ge.s32.totalorder %v984, 18
  %vm1015 = vcmp.lt.s32.totalorder %v982, 22
  %vm1016 = vcmp.lt.s32.totalorder %v983, 22
  %vm1017 = vcmp.lt.s32.totalorder %v984, 22
  %vm1018 = vmand %vm1012, %vm1015
  %vm1019 = vmand %vm1013, %vm1016
  %vm1020 = vmand %vm1014, %vm1017
  %vm1021 = vmor %vm1009, %vm1018
  %vm1022 = vmor %vm1010, %vm1019
  %vm1023 = vmor %vm1011, %vm1020
  %v1024 = vsel %vm1021, 1, 0
  %v1025 = vsel %vm1022, 1, 0
  %v1026 = vsel %vm1023, 1, 0
  %vm1027 = vcmp.eq.s32.totalorder %v1024, 1
  %vm1028 = vcmp.eq.s32.totalorder %v1025, 1
  %vm1029 = vcmp.eq.s32.totalorder %v1026, 1
  %v1030 = vsel %vm1027, %v943, -inf
  %v1031 = vsel %vm1028, %v948, -inf
  %v1032 = vsel %vm1029, %v953, -inf
  %v1033 = vsel %vm52, %v1030, -inf
  %v1034 = vsel %vm52, %v1031, -inf
  %vm1035 = vcmask 128000
  %v1036 = vsel %vm1035, %v1032, -inf
  %v1037 = vmax.f32 %v1033, %v1034
  %v1038 = vmax.f32 %v1037, %v1036
  %v1039 = vrot.slane %v1038, 4
  %v1040 = vmax.f32 %v1038, %v1039
  %v1041 = vrot.slane %v1040, 2
  %v1042 = vmax.f32 %v1040, %v1041
  %v1043 = vrot.slane %v1042, 1
  %v1044 = vmax.f32 %v1042, %v1043
  %v1049 = vrot.slane %v953, 6
  %v1050 = vrot.slane %v958, 6
  %v1051 = vsel %vm287, %v1049, %v1050
  %v1052 = vrot.slane %v963, 6
  %v1053 = vsel %vm287, %v1050, %v1052
  %v1054 = vrot.slane %v968, 6
  %v1055 = vsel %vm287, %v1052, %v1054
  %v1059 = vsel %vm1027, %v1051, -inf
  %v1060 = vsel %vm1028, %v1053, -inf
  %v1061 = vsel %vm1029, %v1055, -inf
  %v1062 = vsel %vm52, %v1059, -inf
  %v1063 = vsel %vm52, %v1060, -inf
  %v1064 = vsel %vm1035, %v1061, -inf
  %v1065 = vmax.f32 %v1062, %v1063
  %v1066 = vmax.f32 %v1065, %v1064
  %v1067 = vrot.slane %v1066, 4
  %v1068 = vmax.f32 %v1066, %v1067
  %v1069 = vrot.slane %v1068, 2
  %v1070 = vmax.f32 %v1068, %v1069
  %v1071 = vrot.slane %v1070, 1
  %v1072 = vmax.f32 %v1070, %v1071
  %vm1073 = vcmp.lt.s32.totalorder %v982, 2
  %vm1074 = vcmp.ge.s32.totalorder %v982, 4
  %vm1075 = vcmp.lt.s32.totalorder %v982, 6
  %vm1076 = vmand %vm1074, %vm1075
  %vm1077 = vmor %vm1073, %vm1076
  %v1078 = vsel %vm1077, 1, 0
  %vm1079 = vcmp.eq.s32.totalorder %v1078, 1
  %v1081 = vrot.slane %v968, 4
  %v1082 = vrot.slane %v973, 4
  %v1083 = vsel %vm254, %v1081, %v1082
  %1084 = vrot.lane.b32.xlu0 %v1083, 112
  %v1085 = vpop.permute.xlu0 %1084
  %v1087 = vsel %vm1079, %v1085, -inf
  %v1088 = vsel %vm1035, %v1087, -inf
  %v1089 = vrot.slane %v1088, 4
  %v1090 = vmax.f32 %v1088, %v1089
  %v1091 = vrot.slane %v1090, 2
  %v1092 = vmax.f32 %v1090, %v1091
  %v1093 = vrot.slane %v1092, 1
  %v1094 = vmax.f32 %v1092, %v1093
  %v1095 = vrot.slane %v973, 2
  %1096 = vrot.lane.b32.xlu0 %v1095, 112
  %v1097 = vpop.permute.xlu0 %1096
  %v1099 = vsel %vm1079, %v1097, -inf
  %v1100 = vsel %vm1035, %v1099, -inf
  %v1101 = vrot.slane %v1100, 4
  %v1102 = vmax.f32 %v1100, %v1101
  %v1103 = vrot.slane %v1102, 2
  %v1104 = vmax.f32 %v1102, %v1103
  %v1105 = vrot.slane %v1104, 1
  %v1106 = vmax.f32 %v1104, %v1105
  %vm1107 = vcmp.lt.s32.totalorder %v982, 1
  %v1108 = vsel %vm1107, 1, 0
  %vm1109 = vcmp.eq.s32.totalorder %v1108, 1
  %v1110 = vsel %vm1109, %v978, -inf
  %v1112 = vrot.slane %v978, 1
  %1113 = vrot.lane.b32.xlu0 %v1112, 96
  %v1114 = vpop.permute.xlu0 %1113
  %v1116 = vsel %vm1109, %v1114, -inf
  %v1118 = vrot.slane %v1110, 6
  %1119 = vrot.lane.b32.xlu0 %v1118, 96
  %v1120 = vpop.permute.xlu0 %1119
  %v1123 = vrot.slane %v1116, 3
  %v1125 = vsel %vm200, %v1044, %v1094
  %v1126 = vsel %vm287, %v1125, %v1120
  %v1127 = vsel %vm196, %v1126, %v1072
  %v1128 = vsel %vm254, %v1127, %v1106
  %v1129 = vsel %vm198, %v1128, %v1123
  %v1130 = vld [vmem:[%s3 + $0x2] sm:$0x3f]
  %v1131 = vmul.f32 %v1129, %v1130
  %v1132 = vsel %vm1035, %v1131, 0.0
  %1133 = vadd.xlane.f32.xlu0 %v1132
  %v1134 = vpop.xlane.xlu0 %1133
  %v1135 = vsub.f32 0.0, %v1134
  %v1136 = vmul.f32 %v1135, 1.442695
  %v1137 = vpow.pop %v1136
  %v1138 = vadd.f32 %v1137, 1.0
  %v1139 = vrcp.pop %v1138
  %v1140 = vmul.f32 1.0, %v1139
  %v1141 = vsel %vm266, %v1140, 0.0
  %1143 = vset.pattern.permute.xlu0 0
  %1144 = vperm.xlu0 %1143, %v1141
  %v1145 = vpop.permute.xlu0 %1144
  %1147 = vst [vmem:[%s4] sm:$0xff] %v1145
  // Predicated region
  $region18: #{multiscale_forward.1} parent=0 // pred_check
    _
  $region19: #{multiscale_forward.1} parent=0 // pred_check_branch
    %1149 = sbr.rel (0) target = $region21
  $region20: #{multiscale_forward.1} parent=0 // pred_region
    _
  $region21: #{multiscale_forward.1} parent=0 // pred_fallthru
    _
  // Predicated region
  $region22: #{multiscale_forward.1} parent=0 // pred_check
    _
  $region23: #{multiscale_forward.1} parent=0 // pred_check_branch
    %1151 = sbr.rel (0) target = $region25
  $region24: #{multiscale_forward.1} parent=0 // pred_region
    _
  $region25: #{multiscale_forward.1} parent=0 // pred_fallthru
    _

</llo_original>
